<compile_context>
chip_gen: v7x
topology: tpu7x:2x2x1
jax: 0.10.0
libtpu: 0.0.40
codegen_flags: <defaults>
</compile_context>

<pallas_src>
import functools

import numpy as np
import jax
import jax.numpy as jnp
from jax import lax
from jax.experimental import pallas as pl
from jax.experimental.pallas import tpu as pltpu

_NMS3D_RADIUS = 7        # (15x15 soft-NMS window) // 2 == calculate_padding left pad
_COM_STRENGTH = 3.0
_COM_SOFTMAX = 100.0
_EOF_PAD_RADIUS = 4      # pad_size hard-coded in build_from_features
_EOF_CROP_RADIUS = 16
_LANE = 128


def _shift(x, d, axis, fill):
    """y[..., i, ...] = x[..., i + d, ...]; out-of-range entries become `fill`."""
    n = x.shape[axis]
    fill_shape = list(x.shape)
    fill_shape[axis] = abs(d)
    filler = jnp.full(tuple(fill_shape), fill, x.dtype)
    if d > 0:
        kept = lax.slice_in_dim(x, d, n, axis=axis)
        return jnp.concatenate([kept, filler], axis=axis)
    kept = lax.slice_in_dim(x, 0, n + d, axis=axis)
    return jnp.concatenate([filler, kept], axis=axis)


def _window_max_15(x, axis):
    """Sliding max over offsets [-7, +7] along `axis` (borders truncated)."""
    ninf = -jnp.inf
    f = x                                        # forward half: offsets [0, 7]
    f = jnp.maximum(f, _shift(f, 1, axis, ninf))
    f = jnp.maximum(f, _shift(f, 2, axis, ninf))
    f = jnp.maximum(f, _shift(f, 4, axis, ninf))
    b = x                                        # backward half: offsets [-7, 0]
    b = jnp.maximum(b, _shift(b, -1, axis, ninf))
    b = jnp.maximum(b, _shift(b, -2, axis, ninf))
    b = jnp.maximum(b, _shift(b, -4, axis, ninf))
    return jnp.maximum(f, b)                     # offsets [-7, 7]


def _lf_net_kernel(x_ref, band_h_ref, band_w_ref, masks_ref, bias_ref, out_ref):
    # x_ref: (1, C, H, W) VMEM; band_h_ref: (H, H); band_w_ref: (W, W);
    # masks_ref: (2, H, W) [pad mask, crop mask]; bias_ref: (1,) SMEM;
    # out_ref: (1, H, out_w) VMEM.
    C, H, W = x_ref.shape[1], x_ref.shape[2], x_ref.shape[3]
    out_w = out_ref.shape[2]
    x = x_ref[0].astype(jnp.float32)                               # (C, H, W)

    # ---- instance normalization: per-channel mean/var over (H, W), eps=1e-3
    # (matches the module's custom instance_normalization, not InstanceNorm2d).
    # com_strength is folded into the scale: xs == 3 * instance_norm(x).
    inv_hw = jnp.float32(1.0 / (H * W))
    s1 = jnp.sum(jnp.sum(x, axis=2, keepdims=True), axis=1, keepdims=True)
    s2 = jnp.sum(jnp.sum(x * x, axis=2, keepdims=True), axis=1, keepdims=True)
    mean = s1 * inv_hw
    var = s2 * inv_hw - mean * mean                                # biased var
    scale = _COM_STRENGTH * lax.rsqrt(var + 1e-3)
    xs = (x - mean) * scale                                        # (C, H, W)

    # ---- soft_nms_3d: max_pool3d (C,15,15) == channel max + separable 15-max
    chan_max = jnp.max(xs, axis=0)                                 # (H, W)
    max_maps = _window_max_15(_window_max_15(chan_max, axis=1), axis=0)

    exp_maps = jnp.exp(xs - max_maps[None, :, :])                  # (C, H, W)
    exp_sum_c = jnp.sum(exp_maps, axis=0)                          # (H, W)

    # all-ones Conv3d (C,15,15), zero spatial padding 7: a 15x15 box sum of the
    # channel sum -> two banded mat-muls on the otherwise idle MXU.
    sum_ex = jnp.dot(band_h_ref[...],
                     jnp.dot(exp_sum_c, band_w_ref[...],
                             preferred_element_type=jnp.float32),
                     preferred_element_type=jnp.float32)
    sum_ex = sum_ex + bias_ref[0]
    inv_sum = 1.0 / (sum_ex + 1e-6)                                # one per pixel
    probs = exp_maps * inv_sum[None, :, :]                         # (C, H, W)

    # ---- soft_max_and_argmax_1d over the scale dim (argmax branch unused) ----
    mx = jnp.max(probs, axis=0, keepdims=True)
    e1 = jnp.exp(_COM_SOFTMAX * (probs - mx))
    inv_e1 = 1.0 / (jnp.sum(e1, axis=0) + 1e-8)
    max_heat = jnp.sum(probs * e1, axis=0) * inv_e1                # (H, W)

    # ---- end_of_frame pad mask (radius 4), precomputed in the wrapper ----
    max_heat = max_heat * masks_ref[0]

    # ---- strict 5x5 NMS (zero padded): works > max(24 neighbours), separable.
    # (thresholding at 0 mirrors the reference even though max_heat >= 0.)
    works = jnp.where(max_heat < 0.0, jnp.zeros_like(max_heat), max_heat)
    l1 = _shift(works, -1, 1, 0.0)
    r1 = _shift(works, 1, 1, 0.0)
    l2 = _shift(works, -2, 1, 0.0)
    r2 = _shift(works, 2, 1, 0.0)
    row_nbr = jnp.maximum(jnp.maximum(l1, r1), jnp.maximum(l2, r2))  # dy=0, dx!=0
    row_all = jnp.maximum(row_nbr, works)                            # 5-wide incl. centre
    u1 = _shift(row_all, -1, 0, 0.0)
    d1 = _shift(row_all, 1, 0, 0.0)
    u2 = _shift(row_all, -2, 0, 0.0)
    d2 = _shift(row_all, 2, 0, 0.0)
    other_rows = jnp.maximum(jnp.maximum(u1, d1), jnp.maximum(u2, d2))
    peak = works > jnp.maximum(row_nbr, other_rows)

    # ---- end_of_frame crop mask (radius 16) and final NMS scores ----
    scores = jnp.where(peak, max_heat * masks_ref[1], 0.0)         # (H, W)

    # lane-dense store: pad the lane dim up to a multiple of 128 with -1,
    # which is strictly below every valid score (scores >= 0) so the padding
    # can never be selected by the top-k in the wrapper.
    if out_w == W:
        out_ref[0] = scores
    else:
        pad = jnp.full((H, out_w - W), -1.0, jnp.float32)
        out_ref[0] = jnp.concatenate([scores, pad], axis=1)


def _make_constants(H, W):
    """Grid-invariant constants, built once at trace time (numpy -> literals)."""
    r = _NMS3D_RADIUS
    ih = np.arange(H)
    band_h = (np.abs(ih[:, None] - ih[None, :]) <= r).astype(np.float32)  # (H, H)
    iw = np.arange(W)
    band_w = (np.abs(iw[:, None] - iw[None, :]) <= r).astype(np.float32)  # (W, W)

    def eof(radius):
        m = np.zeros((H, W), np.float32)
        if H > 2 * radius and W > 2 * radius:
            m[radius:H - radius, radius:W - radius] = 1.0
        return m

    masks = np.stack([eof(_EOF_PAD_RADIUS), eof(_EOF_CROP_RADIUS)], axis=0)
    return jnp.asarray(band_h), jnp.asarray(band_w), jnp.asarray(masks)


def _nms_scores_pallas(frames, band_h, band_w, masks, conv3d_bias):
    """frames: (N, C, H, W) f32 -> nms scores (N, H, ceil(W/128)*128) f32."""
    N, C, H, W = frames.shape
    out_w = pl.cdiv(W, _LANE) * _LANE
    return pl.pallas_call(
        _lf_net_kernel,
        out_shape=jax.ShapeDtypeStruct((N, H, out_w), jnp.float32),
        grid=(N,),
        in_specs=[
            pl.BlockSpec((1, C, H, W), lambda n: (n, 0, 0, 0)),
            pl.BlockSpec((H, H), lambda n: (0, 0)),      # constant -> DMA'd once
            pl.BlockSpec((W, W), lambda n: (0, 0)),      # constant -> DMA'd once
            pl.BlockSpec((2, H, W), lambda n: (0, 0, 0)),  # constant -> DMA'd once
            pl.BlockSpec(memory_space=pltpu.MemorySpace.SMEM),
        ],
        out_specs=pl.BlockSpec((1, H, out_w), lambda n: (n, 0, 0)),
        compiler_params=pltpu.CompilerParams(
            dimension_semantics=("parallel",)),
    )(frames, band_h, band_w, masks, conv3d_bias)


def lf_net_forward(images, conv3d_bias, k=48):
    """Equivalent of LF_Net.forward (== build_from_features).

    images: (B, T, C, H, W) or (B, C, H, W) float.
    Returns int32 keypoints of shape (num_frames, B*k, 2) with columns (x, y).
    (PyTorch returns int64 indices; int32 is used here.)
    """
    if images.ndim == 4:
        images = images[:, None]                          # (B, 1, C, H, W)
    B, T, C, H, W = images.shape
    # frame-major flattening so output ordering matches the PyTorch loop.
    frames = jnp.transpose(images, (1, 0, 2, 3, 4)).reshape(T * B, C, H, W)
    band_h, band_w, masks = _make_constants(H, W)
    scores = _nms_scores_pallas(frames.astype(jnp.float32),
                                band_h, band_w, masks, conv3d_bias)
    out_w = scores.shape[-1]
    flat = scores.reshape(T * B, H * out_w)
    # torch.topk(sorted=False) has unspecified order; lax.top_k returns the same
    # top-k set (tie order may differ when many scores are equal).
    _, idx = lax.top_k(flat, k)                           # (T*B, k)
    kpx = (idx % out_w).astype(jnp.int32)
    kpy = (idx // out_w).astype(jnp.int32)
    kpts = jnp.stack([kpx, kpy], axis=-1)                 # (T*B, k, 2)
    return kpts.reshape(T, B * k, 2)


if __name__ == "__main__":
    key = jax.random.PRNGKey(0)
    B, T, C, H, W = 2, 2, 4, 48, 48
    images = jax.random.normal(key, (B, T, C, H, W), dtype=jnp.float32)
    # Conv3d weight is all-ones (implicit in the windowed box sum); its bias is
    # randomly initialized in the PyTorch __init__ -> set deterministically to 0.
    conv3d_bias = jnp.zeros((1,), dtype=jnp.float32)

    fwd = jax.jit(functools.partial(lf_net_forward, k=48))
    kpts = jax.block_until_ready(fwd(images, conv3d_bias))
    assert kpts.shape == (T, B * 48, 2), kpts.shape
    assert bool(jnp.all(kpts >= 0))
    assert bool(jnp.all(kpts[..., 0] < W)) and bool(jnp.all(kpts[..., 1] < H))
    print("KERNEL_OK")
</pallas_src>

<mosaic_0001>
module attributes {stable_mosaic.version = 11 : i64} {
  func.func @_lf_net_kernel(%arg0: i32, %arg1: memref<1x4x48x48xf32, #tpu.memory_space<vmem>>, %arg2: memref<48x48xf32, #tpu.memory_space<vmem>>, %arg3: memref<48x48xf32, #tpu.memory_space<vmem>>, %arg4: memref<2x48x48xf32, #tpu.memory_space<vmem>>, %arg5: memref<1xf32, #tpu.memory_space<smem>>, %arg6: memref<1x48x128xf32, #tpu.memory_space<vmem>>) attributes {dimension_semantics = [#tpu.dimension_semantics<parallel>], iteration_bounds = array<i64: 4>, scalar_prefetch = 0 : i64, scratch_operands = 0 : i64, tpu.core_type = #tpu.core_type<tc>, window_params = [{transform_indices = @transform_0, window_bounds = array<i64: 1, 4, 48, 48>}, {pipeline_mode = #tpu.pipeline_mode<synchronous>, transform_indices = @transform_1, window_bounds = array<i64: 48, 48>}, {pipeline_mode = #tpu.pipeline_mode<synchronous>, transform_indices = @transform_2, window_bounds = array<i64: 48, 48>}, {pipeline_mode = #tpu.pipeline_mode<synchronous>, transform_indices = @transform_3, window_bounds = array<i64: 2, 48, 48>}, {transform_indices = @transform_4, window_bounds = array<i64: 1>}, {transform_indices = @transform_5, window_bounds = array<i64: 1, 48, 128>}]} {
    %c0 = arith.constant 0 : index
    %c0_0 = arith.constant 0 : index
    %c0_1 = arith.constant 0 : index
    %c0_2 = arith.constant 0 : index
    %0 = vector.load %arg1[%c0, %c0_0, %c0_1, %c0_2] : memref<1x4x48x48xf32, #tpu.memory_space<vmem>>, vector<1x4x48x48xf32>
    %1 = vector.shape_cast %0 : vector<1x4x48x48xf32> to vector<4x48x48xf32>
    %cst = arith.constant dense<0.000000e+00> : vector<4x48xf32>
    %2 = vector.multi_reduction <add>, %1, %cst [2] : vector<4x48x48xf32> to vector<4x48xf32>
    %3 = vector.shape_cast %2 : vector<4x48xf32> to vector<4x48x1xf32>
    %cst_3 = arith.constant dense<0.000000e+00> : vector<4x1xf32>
    %4 = vector.multi_reduction <add>, %3, %cst_3 [1] : vector<4x48x1xf32> to vector<4x1xf32>
    %5 = vector.shape_cast %4 : vector<4x1xf32> to vector<4x1x1xf32>
    %6 = arith.mulf %1, %1 : vector<4x48x48xf32>
    %cst_4 = arith.constant dense<0.000000e+00> : vector<4x48xf32>
    %7 = vector.multi_reduction <add>, %6, %cst_4 [2] : vector<4x48x48xf32> to vector<4x48xf32>
    %8 = vector.shape_cast %7 : vector<4x48xf32> to vector<4x48x1xf32>
    %cst_5 = arith.constant dense<0.000000e+00> : vector<4x1xf32>
    %9 = vector.multi_reduction <add>, %8, %cst_5 [1] : vector<4x48x1xf32> to vector<4x1xf32>
    %10 = vector.shape_cast %9 : vector<4x1xf32> to vector<4x1x1xf32>
    %cst_6 = arith.constant 4.34027781E-4 : f32
    %11 = vector.broadcast %cst_6 : f32 to vector<4x1x1xf32>
    %12 = arith.mulf %5, %11 : vector<4x1x1xf32>
    %cst_7 = arith.constant 4.34027781E-4 : f32
    %13 = vector.broadcast %cst_7 : f32 to vector<4x1x1xf32>
    %14 = arith.mulf %10, %13 : vector<4x1x1xf32>
    %15 = arith.mulf %12, %12 : vector<4x1x1xf32>
    %16 = arith.subf %14, %15 : vector<4x1x1xf32>
    %cst_8 = arith.constant 1.000000e-03 : f32
    %17 = vector.broadcast %cst_8 : f32 to vector<4x1x1xf32>
    %18 = arith.addf %16, %17 : vector<4x1x1xf32>
    %19 = math.rsqrt %18 : vector<4x1x1xf32>
    %cst_9 = arith.constant 3.000000e+00 : f32
    %20 = vector.broadcast %cst_9 : f32 to vector<4x1x1xf32>
    %21 = arith.mulf %20, %19 : vector<4x1x1xf32>
    %22 = vector.broadcast %12 : vector<4x1x1xf32> to vector<4x48x48xf32>
    %23 = arith.subf %1, %22 : vector<4x48x48xf32>
    %24 = vector.broadcast %21 : vector<4x1x1xf32> to vector<4x48x48xf32>
    %25 = arith.mulf %23, %24 : vector<4x48x48xf32>
    %cst_10 = arith.constant dense<0xFF800000> : vector<48x48xf32>
    %26 = vector.multi_reduction <maximumf>, %25, %cst_10 [0] : vector<4x48x48xf32> to vector<48x48xf32>
    %cst_11 = arith.constant 0xFF800000 : f32
    %27 = vector.broadcast %cst_11 : f32 to vector<48x1xf32>
    %28 = vector.extract_strided_slice %26 {offsets = [0, 1], sizes = [48, 47], strides = [1, 1]} : vector<48x48xf32> to vector<48x47xf32>
    %29 = tpu.concatenate %28, %27 in 1 : vector<48x47xf32>, vector<48x1xf32> -> vector<48x48xf32>
    %30 = arith.maximumf %26, %29 : vector<48x48xf32>
    %cst_12 = arith.constant 0xFF800000 : f32
    %31 = vector.broadcast %cst_12 : f32 to vector<48x2xf32>
    %32 = vector.extract_strided_slice %30 {offsets = [0, 2], sizes = [48, 46], strides = [1, 1]} : vector<48x48xf32> to vector<48x46xf32>
    %33 = tpu.concatenate %32, %31 in 1 : vector<48x46xf32>, vector<48x2xf32> -> vector<48x48xf32>
    %34 = arith.maximumf %30, %33 : vector<48x48xf32>
    %cst_13 = arith.constant 0xFF800000 : f32
    %35 = vector.broadcast %cst_13 : f32 to vector<48x4xf32>
    %36 = vector.extract_strided_slice %34 {offsets = [0, 4], sizes = [48, 44], strides = [1, 1]} : vector<48x48xf32> to vector<48x44xf32>
    %37 = tpu.concatenate %36, %35 in 1 : vector<48x44xf32>, vector<48x4xf32> -> vector<48x48xf32>
    %38 = arith.maximumf %34, %37 : vector<48x48xf32>
    %cst_14 = arith.constant 0xFF800000 : f32
    %39 = vector.broadcast %cst_14 : f32 to vector<48x1xf32>
    %40 = vector.extract_strided_slice %26 {offsets = [0, 0], sizes = [48, 47], strides = [1, 1]} : vector<48x48xf32> to vector<48x47xf32>
    %41 = tpu.concatenate %39, %40 in 1 : vector<48x1xf32>, vector<48x47xf32> -> vector<48x48xf32>
    %42 = arith.maximumf %26, %41 : vector<48x48xf32>
    %cst_15 = arith.constant 0xFF800000 : f32
    %43 = vector.broadcast %cst_15 : f32 to vector<48x2xf32>
    %44 = vector.extract_strided_slice %42 {offsets = [0, 0], sizes = [48, 46], strides = [1, 1]} : vector<48x48xf32> to vector<48x46xf32>
    %45 = tpu.concatenate %43, %44 in 1 : vector<48x2xf32>, vector<48x46xf32> -> vector<48x48xf32>
    %46 = arith.maximumf %42, %45 : vector<48x48xf32>
    %cst_16 = arith.constant 0xFF800000 : f32
    %47 = vector.broadcast %cst_16 : f32 to vector<48x4xf32>
    %48 = vector.extract_strided_slice %46 {offsets = [0, 0], sizes = [48, 44], strides = [1, 1]} : vector<48x48xf32> to vector<48x44xf32>
    %49 = tpu.concatenate %47, %48 in 1 : vector<48x4xf32>, vector<48x44xf32> -> vector<48x48xf32>
    %50 = arith.maximumf %46, %49 : vector<48x48xf32>
    %51 = arith.maximumf %38, %50 : vector<48x48xf32>
    %cst_17 = arith.constant 0xFF800000 : f32
    %52 = vector.broadcast %cst_17 : f32 to vector<1x48xf32>
    %53 = vector.extract_strided_slice %51 {offsets = [1, 0], sizes = [47, 48], strides = [1, 1]} : vector<48x48xf32> to vector<47x48xf32>
    %54 = tpu.concatenate %53, %52 in 0 : vector<47x48xf32>, vector<1x48xf32> -> vector<48x48xf32>
    %55 = arith.maximumf %51, %54 : vector<48x48xf32>
    %cst_18 = arith.constant 0xFF800000 : f32
    %56 = vector.broadcast %cst_18 : f32 to vector<2x48xf32>
    %57 = vector.extract_strided_slice %55 {offsets = [2, 0], sizes = [46, 48], strides = [1, 1]} : vector<48x48xf32> to vector<46x48xf32>
    %58 = tpu.concatenate %57, %56 in 0 : vector<46x48xf32>, vector<2x48xf32> -> vector<48x48xf32>
    %59 = arith.maximumf %55, %58 : vector<48x48xf32>
    %cst_19 = arith.constant 0xFF800000 : f32
    %60 = vector.broadcast %cst_19 : f32 to vector<4x48xf32>
    %61 = vector.extract_strided_slice %59 {offsets = [4, 0], sizes = [44, 48], strides = [1, 1]} : vector<48x48xf32> to vector<44x48xf32>
    %62 = tpu.concatenate %61, %60 in 0 : vector<44x48xf32>, vector<4x48xf32> -> vector<48x48xf32>
    %63 = arith.maximumf %59, %62 : vector<48x48xf32>
    %cst_20 = arith.constant 0xFF800000 : f32
    %64 = vector.broadcast %cst_20 : f32 to vector<1x48xf32>
    %65 = vector.extract_strided_slice %51 {offsets = [0, 0], sizes = [47, 48], strides = [1, 1]} : vector<48x48xf32> to vector<47x48xf32>
    %66 = tpu.concatenate %64, %65 in 0 : vector<1x48xf32>, vector<47x48xf32> -> vector<48x48xf32>
    %67 = arith.maximumf %51, %66 : vector<48x48xf32>
    %cst_21 = arith.constant 0xFF800000 : f32
    %68 = vector.broadcast %cst_21 : f32 to vector<2x48xf32>
    %69 = vector.extract_strided_slice %67 {offsets = [0, 0], sizes = [46, 48], strides = [1, 1]} : vector<48x48xf32> to vector<46x48xf32>
    %70 = tpu.concatenate %68, %69 in 0 : vector<2x48xf32>, vector<46x48xf32> -> vector<48x48xf32>
    %71 = arith.maximumf %67, %70 : vector<48x48xf32>
    %cst_22 = arith.constant 0xFF800000 : f32
    %72 = vector.broadcast %cst_22 : f32 to vector<4x48xf32>
    %73 = vector.extract_strided_slice %71 {offsets = [0, 0], sizes = [44, 48], strides = [1, 1]} : vector<48x48xf32> to vector<44x48xf32>
    %74 = tpu.concatenate %72, %73 in 0 : vector<4x48xf32>, vector<44x48xf32> -> vector<48x48xf32>
    %75 = arith.maximumf %71, %74 : vector<48x48xf32>
    %76 = arith.maximumf %63, %75 : vector<48x48xf32>
    %77 = vector.shape_cast %76 : vector<48x48xf32> to vector<1x48x48xf32>
    %78 = vector.broadcast %77 : vector<1x48x48xf32> to vector<4x48x48xf32>
    %79 = arith.subf %25, %78 : vector<4x48x48xf32>
    %80 = math.exp %79 : vector<4x48x48xf32>
    %cst_23 = arith.constant dense<0.000000e+00> : vector<48x48xf32>
    %81 = vector.multi_reduction <add>, %80, %cst_23 [0] : vector<4x48x48xf32> to vector<48x48xf32>
    %c0_24 = arith.constant 0 : index
    %c0_25 = arith.constant 0 : index
    %82 = vector.load %arg2[%c0_24, %c0_25] : memref<48x48xf32, #tpu.memory_space<vmem>>, vector<48x48xf32>
    %c0_26 = arith.constant 0 : index
    %c0_27 = arith.constant 0 : index
    %83 = vector.load %arg3[%c0_26, %c0_27] : memref<48x48xf32, #tpu.memory_space<vmem>>, vector<48x48xf32>
    %cst_28 = arith.constant dense<0.000000e+00> : vector<48x48xf32>
    %84 = tpu.matmul %81, %83, %cst_28 {dimension_numbers = #tpu.dot_dimension_numbers<[1], [0], [0], [1], [0, 0, 1, 1], [], []>} : vector<48x48xf32>, vector<48x48xf32>, vector<48x48xf32> -> vector<48x48xf32>
    %cst_29 = arith.constant dense<0.000000e+00> : vector<48x48xf32>
    %85 = tpu.matmul %82, %84, %cst_29 {dimension_numbers = #tpu.dot_dimension_numbers<[1], [0], [0], [1], [0, 0, 1, 1], [], []>} : vector<48x48xf32>, vector<48x48xf32>, vector<48x48xf32> -> vector<48x48xf32>
    %c0_30 = arith.constant 0 : index
    %86 = memref.load %arg5[%c0_30] : memref<1xf32, #tpu.memory_space<smem>>
    %87 = vector.broadcast %86 : f32 to vector<48x48xf32>
    %88 = arith.addf %85, %87 : vector<48x48xf32>
    %cst_31 = arith.constant 9.99999997E-7 : f32
    %89 = vector.broadcast %cst_31 : f32 to vector<48x48xf32>
    %90 = arith.addf %88, %89 : vector<48x48xf32>
    %cst_32 = arith.constant 1.000000e+00 : f32
    %91 = vector.broadcast %cst_32 : f32 to vector<48x48xf32>
    %92 = arith.divf %91, %90 : vector<48x48xf32>
    %93 = vector.shape_cast %92 : vector<48x48xf32> to vector<1x48x48xf32>
    %94 = vector.broadcast %93 : vector<1x48x48xf32> to vector<4x48x48xf32>
    %95 = arith.mulf %80, %94 : vector<4x48x48xf32>
    %cst_33 = arith.constant dense<0xFF800000> : vector<48x48xf32>
    %96 = vector.multi_reduction <maximumf>, %95, %cst_33 [0] : vector<4x48x48xf32> to vector<48x48xf32>
    %97 = vector.shape_cast %96 : vector<48x48xf32> to vector<1x48x48xf32>
    %98 = vector.broadcast %97 : vector<1x48x48xf32> to vector<4x48x48xf32>
    %99 = arith.subf %95, %98 : vector<4x48x48xf32>
    %cst_34 = arith.constant 1.000000e+02 : f32
    %100 = vector.broadcast %cst_34 : f32 to vector<4x48x48xf32>
    %101 = arith.mulf %100, %99 : vector<4x48x48xf32>
    %102 = math.exp %101 : vector<4x48x48xf32>
    %cst_35 = arith.constant dense<0.000000e+00> : vector<48x48xf32>
    %103 = vector.multi_reduction <add>, %102, %cst_35 [0] : vector<4x48x48xf32> to vector<48x48xf32>
    %cst_36 = arith.constant 9.99999993E-9 : f32
    %104 = vector.broadcast %cst_36 : f32 to vector<48x48xf32>
    %105 = arith.addf %103, %104 : vector<48x48xf32>
    %cst_37 = arith.constant 1.000000e+00 : f32
    %106 = vector.broadcast %cst_37 : f32 to vector<48x48xf32>
    %107 = arith.divf %106, %105 : vector<48x48xf32>
    %108 = arith.mulf %95, %102 : vector<4x48x48xf32>
    %cst_38 = arith.constant dense<0.000000e+00> : vector<48x48xf32>
    %109 = vector.multi_reduction <add>, %108, %cst_38 [0] : vector<4x48x48xf32> to vector<48x48xf32>
    %110 = arith.mulf %109, %107 : vector<48x48xf32>
    %c0_39 = arith.constant 0 : index
    %c0_40 = arith.constant 0 : index
    %c0_41 = arith.constant 0 : index
    %111 = vector.load %arg4[%c0_39, %c0_40, %c0_41] : memref<2x48x48xf32, #tpu.memory_space<vmem>>, vector<1x48x48xf32>
    %112 = vector.shape_cast %111 : vector<1x48x48xf32> to vector<48x48xf32>
    %113 = arith.mulf %110, %112 : vector<48x48xf32>
    %cst_42 = arith.constant 0.000000e+00 : f32
    %114 = vector.broadcast %cst_42 : f32 to vector<48x48xf32>
    %115 = arith.cmpf olt, %113, %114 : vector<48x48xf32>
    %cst_43 = arith.constant 0.000000e+00 : f32
    %116 = vector.broadcast %cst_43 : f32 to vector<48x48xf32>
    %117 = arith.select %115, %116, %113 : vector<48x48xi1>, vector<48x48xf32>
    %cst_44 = arith.constant 0.000000e+00 : f32
    %118 = vector.broadcast %cst_44 : f32 to vector<48x1xf32>
    %119 = vector.extract_strided_slice %117 {offsets = [0, 0], sizes = [48, 47], strides = [1, 1]} : vector<48x48xf32> to vector<48x47xf32>
    %120 = tpu.concatenate %118, %119 in 1 : vector<48x1xf32>, vector<48x47xf32> -> vector<48x48xf32>
    %cst_45 = arith.constant 0.000000e+00 : f32
    %121 = vector.broadcast %cst_45 : f32 to vector<48x1xf32>
    %122 = vector.extract_strided_slice %117 {offsets = [0, 1], sizes = [48, 47], strides = [1, 1]} : vector<48x48xf32> to vector<48x47xf32>
    %123 = tpu.concatenate %122, %121 in 1 : vector<48x47xf32>, vector<48x1xf32> -> vector<48x48xf32>
    %cst_46 = arith.constant 0.000000e+00 : f32
    %124 = vector.broadcast %cst_46 : f32 to vector<48x2xf32>
    %125 = vector.extract_strided_slice %117 {offsets = [0, 0], sizes = [48, 46], strides = [1, 1]} : vector<48x48xf32> to vector<48x46xf32>
    %126 = tpu.concatenate %124, %125 in 1 : vector<48x2xf32>, vector<48x46xf32> -> vector<48x48xf32>
    %cst_47 = arith.constant 0.000000e+00 : f32
    %127 = vector.broadcast %cst_47 : f32 to vector<48x2xf32>
    %128 = vector.extract_strided_slice %117 {offsets = [0, 2], sizes = [48, 46], strides = [1, 1]} : vector<48x48xf32> to vector<48x46xf32>
    %129 = tpu.concatenate %128, %127 in 1 : vector<48x46xf32>, vector<48x2xf32> -> vector<48x48xf32>
    %130 = arith.maximumf %120, %123 : vector<48x48xf32>
    %131 = arith.maximumf %126, %129 : vector<48x48xf32>
    %132 = arith.maximumf %130, %131 : vector<48x48xf32>
    %133 = arith.maximumf %132, %117 : vector<48x48xf32>
    %cst_48 = arith.constant 0.000000e+00 : f32
    %134 = vector.broadcast %cst_48 : f32 to vector<1x48xf32>
    %135 = vector.extract_strided_slice %133 {offsets = [0, 0], sizes = [47, 48], strides = [1, 1]} : vector<48x48xf32> to vector<47x48xf32>
    %136 = tpu.concatenate %134, %135 in 0 : vector<1x48xf32>, vector<47x48xf32> -> vector<48x48xf32>
    %cst_49 = arith.constant 0.000000e+00 : f32
    %137 = vector.broadcast %cst_49 : f32 to vector<1x48xf32>
    %138 = vector.extract_strided_slice %133 {offsets = [1, 0], sizes = [47, 48], strides = [1, 1]} : vector<48x48xf32> to vector<47x48xf32>
    %139 = tpu.concatenate %138, %137 in 0 : vector<47x48xf32>, vector<1x48xf32> -> vector<48x48xf32>
    %cst_50 = arith.constant 0.000000e+00 : f32
    %140 = vector.broadcast %cst_50 : f32 to vector<2x48xf32>
    %141 = vector.extract_strided_slice %133 {offsets = [0, 0], sizes = [46, 48], strides = [1, 1]} : vector<48x48xf32> to vector<46x48xf32>
    %142 = tpu.concatenate %140, %141 in 0 : vector<2x48xf32>, vector<46x48xf32> -> vector<48x48xf32>
    %cst_51 = arith.constant 0.000000e+00 : f32
    %143 = vector.broadcast %cst_51 : f32 to vector<2x48xf32>
    %144 = vector.extract_strided_slice %133 {offsets = [2, 0], sizes = [46, 48], strides = [1, 1]} : vector<48x48xf32> to vector<46x48xf32>
    %145 = tpu.concatenate %144, %143 in 0 : vector<46x48xf32>, vector<2x48xf32> -> vector<48x48xf32>
    %146 = arith.maximumf %136, %139 : vector<48x48xf32>
    %147 = arith.maximumf %142, %145 : vector<48x48xf32>
    %148 = arith.maximumf %146, %147 : vector<48x48xf32>
    %149 = arith.maximumf %132, %148 : vector<48x48xf32>
    %150 = arith.cmpf ogt, %117, %149 : vector<48x48xf32>
    %c1 = arith.constant 1 : index
    %c0_52 = arith.constant 0 : index
    %c0_53 = arith.constant 0 : index
    %151 = vector.load %arg4[%c1, %c0_52, %c0_53] : memref<2x48x48xf32, #tpu.memory_space<vmem>>, vector<1x48x48xf32>
    %152 = vector.shape_cast %151 : vector<1x48x48xf32> to vector<48x48xf32>
    %153 = arith.mulf %113, %152 : vector<48x48xf32>
    %cst_54 = arith.constant 0.000000e+00 : f32
    %154 = vector.broadcast %cst_54 : f32 to vector<48x48xf32>
    %155 = arith.select %150, %153, %154 : vector<48x48xi1>, vector<48x48xf32>
    %cst_55 = arith.constant -1.000000e+00 : f32
    %156 = vector.broadcast %cst_55 : f32 to vector<48x80xf32>
    %157 = tpu.concatenate %155, %156 in 1 : vector<48x48xf32>, vector<48x80xf32> -> vector<48x128xf32>
    %c0_56 = arith.constant 0 : index
    %c0_57 = arith.constant 0 : index
    %c0_58 = arith.constant 0 : index
    %158 = vector.load %arg6[%c0_56, %c0_57, %c0_58] : memref<1x48x128xf32, #tpu.memory_space<vmem>>, vector<1x48x128xf32>
    %159 = vector.shape_cast %158 : vector<1x48x128xf32> to vector<48x128xf32>
    %160 = vector.shape_cast %157 : vector<48x128xf32> to vector<1x48x128xf32>
    tpu.vector_store %arg6[%c0_56, %c0_57, %c0_58], %160 {strides = array<i32>} : memref<1x48x128xf32, #tpu.memory_space<vmem>>, vector<1x48x128xf32>,
    return
  }
  func.func @transform_0(%arg0: i32) -> (i32, i32, i32, i32) {
    %c0_i32 = arith.constant 0 : i32
    %c0_i32_0 = arith.constant 0 : i32
    %c0_i32_1 = arith.constant 0 : i32
    %c0_i32_2 = arith.constant 0 : i32
    return %arg0, %c0_i32, %c0_i32_0, %c0_i32_1 : i32, i32, i32, i32
  }
  func.func @transform_1(%arg0: i32) -> (i32, i32) {
    %c0_i32 = arith.constant 0 : i32
    %c0_i32_0 = arith.constant 0 : i32
    %c0_i32_1 = arith.constant 0 : i32
    return %c0_i32, %c0_i32_0 : i32, i32
  }
  func.func @transform_2(%arg0: i32) -> (i32, i32) {
    %c0_i32 = arith.constant 0 : i32
    %c0_i32_0 = arith.constant 0 : i32
    %c0_i32_1 = arith.constant 0 : i32
    return %c0_i32, %c0_i32_0 : i32, i32
  }
  func.func @transform_3(%arg0: i32) -> (i32, i32, i32) {
    %c0_i32 = arith.constant 0 : i32
    %c0_i32_0 = arith.constant 0 : i32
    %c0_i32_1 = arith.constant 0 : i32
    %c0_i32_2 = arith.constant 0 : i32
    return %c0_i32, %c0_i32_0, %c0_i32_1 : i32, i32, i32
  }
  func.func @transform_4(%arg0: i32) -> i32 {
    %c0_i32 = arith.constant 0 : i32
    %c0_i32_0 = arith.constant 0 : i32
    return %c0_i32 : i32
  }
  func.func @transform_5(%arg0: i32) -> (i32, i32, i32) {
    %c0_i32 = arith.constant 0 : i32
    %c0_i32_0 = arith.constant 0 : i32
    %c0_i32_1 = arith.constant 0 : i32
    return %arg0, %c0_i32, %c0_i32_0 : i32, i32, i32
  }
}

</mosaic_0001>

<llo_original>
// kernel: lf_net_forward.1
$region0: #{lf_net_forward.1}
  #allocation0 [shape = 'u32[]', space=smem, size = 0x4, offset = 0x4, fixed_abs, tag = 'smem constant byte address 0x4 - core index']
  #allocation1 [shape = 'u32[144,128]{1,0:T(1,128)}', space=vmem, size = 0x12000, scoped, tag = 'internal scratch']
  #allocation2 [shape = 'f32[1]{0:T(128)S(6)}', space=smem, size = 0x200, scoped, tag = 'scoped memory for lf_net_forward.1']
  %s0 = inlined_call_operand.vmem [shape: f32[4,4,48,48], index: 0, kind: input, shape index: {}]
  %s1 = inlined_call_operand.vmem [shape: f32[48,48], index: 1, kind: input, shape index: {}, may-alias: {1,2}]
  %s2 = inlined_call_operand.vmem [shape: f32[48,48], index: 2, kind: input, shape index: {}, may-alias: {1,2}]
  %s3 = inlined_call_operand.vmem [shape: f32[2,48,48], index: 3, kind: input, shape index: {}]
  %s4 = inlined_call_operand.<no memory space> [shape: f32[1], index: 4, kind: input, shape index: {}]
  %s5 = inlined_call_operand.vmem [shape: f32[4,48,128], index: 5, kind: output, shape index: {}]
  %s6 = sld [smem:[#allocation0]]
  $region53: #{lf_net_forward.1} parent=0
    _
  %s8 = ssub.s32 1, %s6
  %s9 = scalar_select 0, %s8, %s6
  %10 = sst [smem:[#allocation2]] %s4
  loop: start=0, step=1, limit=6
  $region2: #{lf_net_forward.1} parent=0 // loop_pre_header
    _
  $region3: #{lf_net_forward.1} parent=0 // loop_header
    %s12 = sphi 0, %s16
    %p13 = scmp.ge.s32.totalorder %s12, 6
    %s22 = sphi 0, %s24
    %s25 = sphi 0, %s22
    %s26 = sphi 0, %s25
    %s42 = sphi 0, %s26
    %s46 = sphi 0, %s46
    %s48 = sphi 0, %s46
    %s49 = sphi 0, %s48
    %s63 = sphi 0, %s49
    %s67 = sphi 0, %s67
    %s69 = sphi 0, %s67
    %s70 = sphi 0, %s69
    %s84 = sphi 0, %s70
    %s88 = sphi 0, %s88
    %s90 = sphi 0, %s88
    %s91 = sphi 0, %s90
    %s105 = sphi 0, %s91
    %s109 = sphi 0, %s109
    %s111 = sphi 0, %s109
    %s112 = sphi 0, %s111
    %s126 = sphi 0, %s112
    %s132 = sphi 0, %s134
    %s135 = sphi 0, %s132
    %s136 = sphi 0, %s135
    %s152 = sphi 0, %s136
  $region4: #{lf_net_forward.1} parent=0 // loop_header_branch
    %15 = sbr.rel (%p13) target = $region8
  $region5: #{lf_net_forward.1} parent=0 // loop_body
    %s17 = ssub.s32 %s12, 1
    %s18 = ssub.s32 %s12, 2
    %s19 = sadd.s32 %s12, 1
    %s20 = ssub.s32 %s12, %s19
    %p21 = scmp.eq.s32.totalorder %s20, 0
    %s23 = sadd.s32 %s22, 1
    %s24 = scalar_select %p21, %s22, %s23
    %p27 = pneg %p21
    %p28 = scmp.eq.s32.totalorder %s12, 3
    %p29 = por %p27, %p28
    %p30 = scmp.ne.s32.totalorder %s22, %s25
    %p31 = scmp.eq.s32.totalorder %s12, 0
    %p32 = por %p30, %p31
    %p33 = scmp.ne.s32.totalorder %s22, %s25
    %p34 = scmp.eq.s32.totalorder %s17, 3
    %p35 = por %p33, %p34
    %p36 = scmp.ne.s32.totalorder %s25, %s26
    %p37 = scmp.eq.s32.totalorder %s17, 0
    %p38 = por %p36, %p37
    %p39 = scmp.ne.s32.totalorder %s25, %s26
    %p40 = scmp.eq.s32.totalorder %s18, 3
    %p41 = por %p39, %p40
    %p43 = scmp.ne.s32.totalorder %s26, %s42
    %p44 = scmp.eq.s32.totalorder %s18, 0
    %p45 = por %p43, %p44
    %s47 = sadd.s32 %s46, 1
    %p50 = scmp.eq.s32.totalorder %s12, 3
    %p51 = scmp.ne.s32.totalorder %s46, %s48
    %p52 = scmp.eq.s32.totalorder %s12, 0
    %p53 = por %p51, %p52
    %p54 = scmp.ne.s32.totalorder %s46, %s48
    %p55 = scmp.eq.s32.totalorder %s17, 3
    %p56 = por %p54, %p55
    %p57 = scmp.ne.s32.totalorder %s48, %s49
    %p58 = scmp.eq.s32.totalorder %s17, 0
    %p59 = por %p57, %p58
    %p60 = scmp.ne.s32.totalorder %s48, %s49
    %p61 = scmp.eq.s32.totalorder %s18, 3
    %p62 = por %p60, %p61
    %p64 = scmp.ne.s32.totalorder %s49, %s63
    %p65 = scmp.eq.s32.totalorder %s18, 0
    %p66 = por %p64, %p65
    %s68 = sadd.s32 %s67, 1
    %p71 = scmp.eq.s32.totalorder %s12, 3
    %p72 = scmp.ne.s32.totalorder %s67, %s69
    %p73 = scmp.eq.s32.totalorder %s12, 0
    %p74 = por %p72, %p73
    %p75 = scmp.ne.s32.totalorder %s67, %s69
    %p76 = scmp.eq.s32.totalorder %s17, 3
    %p77 = por %p75, %p76
    %p78 = scmp.ne.s32.totalorder %s69, %s70
    %p79 = scmp.eq.s32.totalorder %s17, 0
    %p80 = por %p78, %p79
    %p81 = scmp.ne.s32.totalorder %s69, %s70
    %p82 = scmp.eq.s32.totalorder %s18, 3
    %p83 = por %p81, %p82
    %p85 = scmp.ne.s32.totalorder %s70, %s84
    %p86 = scmp.eq.s32.totalorder %s18, 0
    %p87 = por %p85, %p86
    %s89 = sadd.s32 %s88, 1
    %p92 = scmp.eq.s32.totalorder %s12, 3
    %p93 = scmp.ne.s32.totalorder %s88, %s90
    %p94 = scmp.eq.s32.totalorder %s12, 0
    %p95 = por %p93, %p94
    %p96 = scmp.ne.s32.totalorder %s88, %s90
    %p97 = scmp.eq.s32.totalorder %s17, 3
    %p98 = por %p96, %p97
    %p99 = scmp.ne.s32.totalorder %s90, %s91
    %p100 = scmp.eq.s32.totalorder %s17, 0
    %p101 = por %p99, %p100
    %p102 = scmp.ne.s32.totalorder %s90, %s91
    %p103 = scmp.eq.s32.totalorder %s18, 3
    %p104 = por %p102, %p103
    %p106 = scmp.ne.s32.totalorder %s91, %s105
    %p107 = scmp.eq.s32.totalorder %s18, 0
    %p108 = por %p106, %p107
    %s110 = sadd.s32 %s109, 1
    %p113 = scmp.eq.s32.totalorder %s12, 3
    %p114 = scmp.ne.s32.totalorder %s109, %s111
    %p115 = scmp.eq.s32.totalorder %s12, 0
    %p116 = por %p114, %p115
    %p117 = scmp.ne.s32.totalorder %s109, %s111
    %p118 = scmp.eq.s32.totalorder %s17, 3
    %p119 = por %p117, %p118
    %p120 = scmp.ne.s32.totalorder %s111, %s112
    %p121 = scmp.eq.s32.totalorder %s17, 0
    %p122 = por %p120, %p121
    %p123 = scmp.ne.s32.totalorder %s111, %s112
    %p124 = scmp.eq.s32.totalorder %s18, 3
    %p125 = por %p123, %p124
    %p127 = scmp.ne.s32.totalorder %s112, %s126
    %p128 = scmp.eq.s32.totalorder %s18, 0
    %p129 = por %p127, %p128
    %s130 = ssub.s32 %s12, %s19
    %p131 = scmp.eq.s32.totalorder %s130, 0
    %s133 = sadd.s32 %s132, 1
    %s134 = scalar_select %p131, %s132, %s133
    %p137 = pneg %p131
    %p138 = scmp.eq.s32.totalorder %s12, 3
    %p139 = por %p137, %p138
    %p140 = scmp.ne.s32.totalorder %s132, %s135
    %p141 = scmp.eq.s32.totalorder %s12, 0
    %p142 = por %p140, %p141
    %p143 = scmp.ne.s32.totalorder %s132, %s135
    %p144 = scmp.eq.s32.totalorder %s17, 3
    %p145 = por %p143, %p144
    %p146 = scmp.ne.s32.totalorder %s135, %s136
    %p147 = scmp.eq.s32.totalorder %s17, 0
    %p148 = por %p146, %p147
    %p149 = scmp.ne.s32.totalorder %s135, %s136
    %p150 = scmp.eq.s32.totalorder %s18, 3
    %p151 = por %p149, %p150
    %p153 = scmp.ne.s32.totalorder %s136, %s152
    %p154 = scmp.eq.s32.totalorder %s18, 0
    %p155 = por %p153, %p154
    %p156 = scmp.le.s32.totalorder 1, %s12
    %p157 = scmp.lt.s32.totalorder %s12, 5
    %p158 = pnand %p156, %p157
    %p159 = pneg %p158
    // Predicated region
    $region9: #{lf_net_forward.1} parent=5 // pred_check
      _
    $region10: #{lf_net_forward.1} parent=5 // pred_check_branch
      %161 = sbr.rel (%p158) target = $region12
    $region11: #{lf_net_forward.1} parent=5 // pred_region
      %s162 = ssub.s32 %s12, 1
      // Predicated region
      $region13: #{lf_net_forward.1} parent=11 // pred_check
        %p163 = pneg %p59
      $region14: #{lf_net_forward.1} parent=11 // pred_check_branch
        %165 = sbr.rel (%p163) target = $region16
      $region15: #{lf_net_forward.1} parent=11 // pred_region
        _
      $region16: #{lf_net_forward.1} parent=11 // pred_fallthru
        _
      // Predicated region
      $region17: #{lf_net_forward.1} parent=11 // pred_check
        %p166 = pneg %p80
      $region18: #{lf_net_forward.1} parent=11 // pred_check_branch
        %168 = sbr.rel (%p166) target = $region20
      $region19: #{lf_net_forward.1} parent=11 // pred_region
        _
      $region20: #{lf_net_forward.1} parent=11 // pred_fallthru
        _
      // Predicated region
      $region21: #{lf_net_forward.1} parent=11 // pred_check
        %p169 = pneg %p101
      $region22: #{lf_net_forward.1} parent=11 // pred_check_branch
        %171 = sbr.rel (%p169) target = $region24
      $region23: #{lf_net_forward.1} parent=11 // pred_region
        _
      $region24: #{lf_net_forward.1} parent=11 // pred_fallthru
        _
      // Predicated region
      $region25: #{lf_net_forward.1} parent=11 // pred_check
        %p172 = pneg %p122
      $region26: #{lf_net_forward.1} parent=11 // pred_check_branch
        %174 = sbr.rel (%p172) target = $region28
      $region27: #{lf_net_forward.1} parent=11 // pred_region
        _
      $region28: #{lf_net_forward.1} parent=11 // pred_fallthru
        _
    $region12: #{lf_net_forward.1} parent=5 // pred_fallthru
      _
    %p175 = scmp.lt.s32.totalorder %s12, 4
    // Predicated region
    $region29: #{lf_net_forward.1} parent=5 // pred_check
      %p176 = pneg %p175
    $region30: #{lf_net_forward.1} parent=5 // pred_check_branch
      %178 = sbr.rel (%p176) target = $region32
    $region31: #{lf_net_forward.1} parent=5 // pred_region
      // Predicated region
      $region33: #{lf_net_forward.1} parent=31 // pred_check
        %p179 = pneg %p32
      $region34: #{lf_net_forward.1} parent=31 // pred_check_branch
        %181 = sbr.rel (%p179) target = $region36
      $region35: #{lf_net_forward.1} parent=31 // pred_region
        %p182 = scmp.lt.s32.totalorder %s12, 3
        %s183 = scalar_select %p182, %s12, 3
        %s184 = smul.addr %s183, 24
        %s185 = smul.addr %s184, 8
        %s186 = scalar_lea.vmem %s0, %s185
      $region36: #{lf_net_forward.1} parent=31 // pred_fallthru
        _
    $region32: #{lf_net_forward.1} parent=5 // pred_fallthru
      _
    %p187 = scmp.le.s32.totalorder 1, %s12
    %p188 = scmp.lt.s32.totalorder %s12, 5
    %p189 = pnand %p187, %p188
    %p190 = pneg %p189
    // Predicated region
    $region37: #{lf_net_forward.1} parent=5 // pred_check
      _
    $region38: #{lf_net_forward.1} parent=5 // pred_check_branch
      %192 = sbr.rel (%p189) target = $region40
    $region39: #{lf_net_forward.1} parent=5 // pred_region
      %s193 = ssub.s32 %s12, 1
      %p194 = scmp.lt.s32.totalorder %s17, 3
      %s195 = scalar_select %p194, %s17, 3
      %s196 = smul.addr %s195, 24
      %s197 = smul.addr %s196, 8
      %s198 = scalar_lea.vmem %s0, %s197
      %p199 = pneg %p38
      %p200 = pneg %p35
      %p201 = pneg %p59
      %p202 = pneg %p56
      %p203 = pneg %p80
      %p204 = pneg %p77
      %p205 = pneg %p101
      %p206 = pneg %p98
      %p207 = pneg %p122
      %p208 = pneg %p119
      %p209 = pneg %p148
      %p210 = pneg %p145
      %p211 = scmp.lt.s32.totalorder %s17, 3
      %s212 = scalar_select %p211, %s17, 3
      %s213 = smul.addr %s212, 6
      %s214 = smul.addr %s213, 8
      %s215 = scalar_lea.vmem %s5, %s214
      %p216 = scmp.lt.s32.totalorder %s17, 3
      %s217 = scalar_select %p216, %s17, 3
      %s218 = smul.addr %s217, 24
      %s219 = smul.addr %s218, 8
      %s220 = scalar_lea.vmem %s0, %s219
      %p221 = scmp.lt.s32.totalorder %s17, 3
      %s222 = scalar_select %p221, %s17, 3
      %s223 = smul.addr %s222, 6
      %s224 = smul.addr %s223, 8
      %s225 = scalar_lea.vmem %s5, %s224
      %v226 = vld [vmem:[%s220] sm:$0xff]
      %v227 = vld [vmem:[%s220 + $0x8] sm:$0xff]
      %v228 = vld [vmem:[%s220 + $0x10] sm:$0xff]
      %v229 = vld [vmem:[%s220 + $0x18] sm:$0xff]
      %v230 = vld [vmem:[%s220 + $0x20] sm:$0xff]
      %v231 = vld [vmem:[%s220 + $0x28] sm:$0xff]
      %v232 = vld [vmem:[%s220 + $0x30] sm:$0xff]
      %v233 = vld [vmem:[%s220 + $0x38] sm:$0xff]
      %v234 = vld [vmem:[%s220 + $0x40] sm:$0xff]
      %v235 = vld [vmem:[%s220 + $0x48] sm:$0xff]
      %v236 = vld [vmem:[%s220 + $0x50] sm:$0xff]
      %v237 = vld [vmem:[%s220 + $0x58] sm:$0xff]
      %v238 = vld [vmem:[%s220 + $0x60] sm:$0xff]
      %v239 = vld [vmem:[%s220 + $0x68] sm:$0xff]
      %v240 = vld [vmem:[%s220 + $0x70] sm:$0xff]
      %v241 = vld [vmem:[%s220 + $0x78] sm:$0xff]
      %v242 = vld [vmem:[%s220 + $0x80] sm:$0xff]
      %v243 = vld [vmem:[%s220 + $0x88] sm:$0xff]
      %v244 = vld [vmem:[%s220 + $0x90] sm:$0xff]
      %v245 = vld [vmem:[%s220 + $0x98] sm:$0xff]
      %v246 = vld [vmem:[%s220 + $0xa0] sm:$0xff]
      %v247 = vld [vmem:[%s220 + $0xa8] sm:$0xff]
      %v248 = vld [vmem:[%s220 + $0xb0] sm:$0xff]
      %v249 = vld [vmem:[%s220 + $0xb8] sm:$0xff]
      %vm250 = vcmask 392192
      %v251 = vsel %vm250, %v226, 0.0
      %252 = vadd.xlane.f32.xlu0 %v251
      %v253 = vpop.xlane.xlu0 %252
      %v254 = vsel %vm250, %v227, 0.0
      %255 = vadd.xlane.f32.xlu0 %v254
      %v256 = vpop.xlane.xlu0 %255
      %v257 = vsel %vm250, %v228, 0.0
      %258 = vadd.xlane.f32.xlu0 %v257
      %v259 = vpop.xlane.xlu0 %258
      %v260 = vsel %vm250, %v229, 0.0
      %261 = vadd.xlane.f32.xlu0 %v260
      %v262 = vpop.xlane.xlu0 %261
      %v263 = vsel %vm250, %v230, 0.0
      %264 = vadd.xlane.f32.xlu0 %v263
      %v265 = vpop.xlane.xlu0 %264
      %v266 = vsel %vm250, %v231, 0.0
      %267 = vadd.xlane.f32.xlu0 %v266
      %v268 = vpop.xlane.xlu0 %267
      %v269 = vsel %vm250, %v232, 0.0
      %270 = vadd.xlane.f32.xlu0 %v269
      %v271 = vpop.xlane.xlu0 %270
      %v272 = vsel %vm250, %v233, 0.0
      %273 = vadd.xlane.f32.xlu0 %v272
      %v274 = vpop.xlane.xlu0 %273
      %v275 = vsel %vm250, %v234, 0.0
      %276 = vadd.xlane.f32.xlu0 %v275
      %v277 = vpop.xlane.xlu0 %276
      %v278 = vsel %vm250, %v235, 0.0
      %279 = vadd.xlane.f32.xlu0 %v278
      %v280 = vpop.xlane.xlu0 %279
      %v281 = vsel %vm250, %v236, 0.0
      %282 = vadd.xlane.f32.xlu0 %v281
      %v283 = vpop.xlane.xlu0 %282
      %v284 = vsel %vm250, %v237, 0.0
      %285 = vadd.xlane.f32.xlu0 %v284
      %v286 = vpop.xlane.xlu0 %285
      %v287 = vsel %vm250, %v238, 0.0
      %288 = vadd.xlane.f32.xlu0 %v287
      %v289 = vpop.xlane.xlu0 %288
      %v290 = vsel %vm250, %v239, 0.0
      %291 = vadd.xlane.f32.xlu0 %v290
      %v292 = vpop.xlane.xlu0 %291
      %v293 = vsel %vm250, %v240, 0.0
      %294 = vadd.xlane.f32.xlu0 %v293
      %v295 = vpop.xlane.xlu0 %294
      %v296 = vsel %vm250, %v241, 0.0
      %297 = vadd.xlane.f32.xlu0 %v296
      %v298 = vpop.xlane.xlu0 %297
      %v299 = vsel %vm250, %v242, 0.0
      %300 = vadd.xlane.f32.xlu0 %v299
      %v301 = vpop.xlane.xlu0 %300
      %v302 = vsel %vm250, %v243, 0.0
      %303 = vadd.xlane.f32.xlu0 %v302
      %v304 = vpop.xlane.xlu0 %303
      %v305 = vsel %vm250, %v244, 0.0
      %306 = vadd.xlane.f32.xlu0 %v305
      %v307 = vpop.xlane.xlu0 %306
      %v308 = vsel %vm250, %v245, 0.0
      %309 = vadd.xlane.f32.xlu0 %v308
      %v310 = vpop.xlane.xlu0 %309
      %v311 = vsel %vm250, %v246, 0.0
      %312 = vadd.xlane.f32.xlu0 %v311
      %v313 = vpop.xlane.xlu0 %312
      %v314 = vsel %vm250, %v247, 0.0
      %315 = vadd.xlane.f32.xlu0 %v314
      %v316 = vpop.xlane.xlu0 %315
      %v317 = vsel %vm250, %v248, 0.0
      %318 = vadd.xlane.f32.xlu0 %v317
      %v319 = vpop.xlane.xlu0 %318
      %v320 = vsel %vm250, %v249, 0.0
      %321 = vadd.xlane.f32.xlu0 %v320
      %v322 = vpop.xlane.xlu0 %321
      %v323 = vadd.f32 %v253, %v256
      %v324 = vadd.f32 %v323, %v259
      %v325 = vadd.f32 %v324, %v262
      %v326 = vadd.f32 %v325, %v265
      %v327 = vadd.f32 %v326, %v268
      %v328 = vrot.slane %v327, 4
      %v329 = vadd.f32 %v327, %v328
      %v330 = vrot.slane %v329, 2
      %v331 = vadd.f32 %v329, %v330
      %v332 = vrot.slane %v331, 1
      %v333 = vadd.f32 %v331, %v332
      %v334 = vadd.f32 %v271, %v274
      %v335 = vadd.f32 %v334, %v277
      %v336 = vadd.f32 %v335, %v280
      %v337 = vadd.f32 %v336, %v283
      %v338 = vadd.f32 %v337, %v286
      %v339 = vrot.slane %v338, 4
      %v340 = vadd.f32 %v338, %v339
      %v341 = vrot.slane %v340, 2
      %v342 = vadd.f32 %v340, %v341
      %v343 = vrot.slane %v342, 1
      %v344 = vadd.f32 %v342, %v343
      %v345 = vadd.f32 %v289, %v292
      %v346 = vadd.f32 %v345, %v295
      %v347 = vadd.f32 %v346, %v298
      %v348 = vadd.f32 %v347, %v301
      %v349 = vadd.f32 %v348, %v304
      %v350 = vrot.slane %v349, 4
      %v351 = vadd.f32 %v349, %v350
      %v352 = vrot.slane %v351, 2
      %v353 = vadd.f32 %v351, %v352
      %v354 = vrot.slane %v353, 1
      %v355 = vadd.f32 %v353, %v354
      %v356 = vadd.f32 %v307, %v310
      %v357 = vadd.f32 %v356, %v313
      %v358 = vadd.f32 %v357, %v316
      %v359 = vadd.f32 %v358, %v319
      %v360 = vadd.f32 %v359, %v322
      %v361 = vrot.slane %v360, 4
      %v362 = vadd.f32 %v360, %v361
      %v363 = vrot.slane %v362, 2
      %v364 = vadd.f32 %v362, %v363
      %v365 = vrot.slane %v364, 1
      %v366 = vadd.f32 %v364, %v365
      %v367 = vmul.f32 %v226, %v226
      %v368 = vmul.f32 %v227, %v227
      %v369 = vmul.f32 %v228, %v228
      %v370 = vmul.f32 %v229, %v229
      %v371 = vmul.f32 %v230, %v230
      %v372 = vmul.f32 %v231, %v231
      %v373 = vmul.f32 %v232, %v232
      %v374 = vmul.f32 %v233, %v233
      %v375 = vmul.f32 %v234, %v234
      %v376 = vmul.f32 %v235, %v235
      %v377 = vmul.f32 %v236, %v236
      %v378 = vmul.f32 %v237, %v237
      %v379 = vmul.f32 %v238, %v238
      %v380 = vmul.f32 %v239, %v239
      %v381 = vmul.f32 %v240, %v240
      %v382 = vmul.f32 %v241, %v241
      %v383 = vmul.f32 %v242, %v242
      %v384 = vmul.f32 %v243, %v243
      %v385 = vmul.f32 %v244, %v244
      %v386 = vmul.f32 %v245, %v245
      %v387 = vmul.f32 %v246, %v246
      %v388 = vmul.f32 %v247, %v247
      %v389 = vmul.f32 %v248, %v248
      %v390 = vmul.f32 %v249, %v249
      %v391 = vsel %vm250, %v367, 0.0
      %392 = vadd.xlane.f32.xlu0 %v391
      %v393 = vpop.xlane.xlu0 %392
      %v394 = vsel %vm250, %v368, 0.0
      %395 = vadd.xlane.f32.xlu0 %v394
      %v396 = vpop.xlane.xlu0 %395
      %v397 = vsel %vm250, %v369, 0.0
      %398 = vadd.xlane.f32.xlu0 %v397
      %v399 = vpop.xlane.xlu0 %398
      %v400 = vsel %vm250, %v370, 0.0
      %401 = vadd.xlane.f32.xlu0 %v400
      %v402 = vpop.xlane.xlu0 %401
      %v403 = vsel %vm250, %v371, 0.0
      %404 = vadd.xlane.f32.xlu0 %v403
      %v405 = vpop.xlane.xlu0 %404
      %v406 = vsel %vm250, %v372, 0.0
      %407 = vadd.xlane.f32.xlu0 %v406
      %v408 = vpop.xlane.xlu0 %407
      %v409 = vsel %vm250, %v373, 0.0
      %410 = vadd.xlane.f32.xlu0 %v409
      %v411 = vpop.xlane.xlu0 %410
      %v412 = vsel %vm250, %v374, 0.0
      %413 = vadd.xlane.f32.xlu0 %v412
      %v414 = vpop.xlane.xlu0 %413
      %v415 = vsel %vm250, %v375, 0.0
      %416 = vadd.xlane.f32.xlu0 %v415
      %v417 = vpop.xlane.xlu0 %416
      %v418 = vsel %vm250, %v376, 0.0
      %419 = vadd.xlane.f32.xlu0 %v418
      %v420 = vpop.xlane.xlu0 %419
      %v421 = vsel %vm250, %v377, 0.0
      %422 = vadd.xlane.f32.xlu0 %v421
      %v423 = vpop.xlane.xlu0 %422
      %v424 = vsel %vm250, %v378, 0.0
      %425 = vadd.xlane.f32.xlu0 %v424
      %v426 = vpop.xlane.xlu0 %425
      %v427 = vsel %vm250, %v379, 0.0
      %428 = vadd.xlane.f32.xlu0 %v427
      %v429 = vpop.xlane.xlu0 %428
      %v430 = vsel %vm250, %v380, 0.0
      %431 = vadd.xlane.f32.xlu0 %v430
      %v432 = vpop.xlane.xlu0 %431
      %v433 = vsel %vm250, %v381, 0.0
      %434 = vadd.xlane.f32.xlu0 %v433
      %v435 = vpop.xlane.xlu0 %434
      %v436 = vsel %vm250, %v382, 0.0
      %437 = vadd.xlane.f32.xlu0 %v436
      %v438 = vpop.xlane.xlu0 %437
      %v439 = vsel %vm250, %v383, 0.0
      %440 = vadd.xlane.f32.xlu0 %v439
      %v441 = vpop.xlane.xlu0 %440
      %v442 = vsel %vm250, %v384, 0.0
      %443 = vadd.xlane.f32.xlu0 %v442
      %v444 = vpop.xlane.xlu0 %443
      %v445 = vsel %vm250, %v385, 0.0
      %446 = vadd.xlane.f32.xlu0 %v445
      %v447 = vpop.xlane.xlu0 %446
      %v448 = vsel %vm250, %v386, 0.0
      %449 = vadd.xlane.f32.xlu0 %v448
      %v450 = vpop.xlane.xlu0 %449
      %v451 = vsel %vm250, %v387, 0.0
      %452 = vadd.xlane.f32.xlu0 %v451
      %v453 = vpop.xlane.xlu0 %452
      %v454 = vsel %vm250, %v388, 0.0
      %455 = vadd.xlane.f32.xlu0 %v454
      %v456 = vpop.xlane.xlu0 %455
      %v457 = vsel %vm250, %v389, 0.0
      %458 = vadd.xlane.f32.xlu0 %v457
      %v459 = vpop.xlane.xlu0 %458
      %v460 = vsel %vm250, %v390, 0.0
      %461 = vadd.xlane.f32.xlu0 %v460
      %v462 = vpop.xlane.xlu0 %461
      %v463 = vadd.f32 %v393, %v396
      %v464 = vadd.f32 %v463, %v399
      %v465 = vadd.f32 %v464, %v402
      %v466 = vadd.f32 %v465, %v405
      %v467 = vadd.f32 %v466, %v408
      %v468 = vrot.slane %v467, 4
      %v469 = vadd.f32 %v467, %v468
      %v470 = vrot.slane %v469, 2
      %v471 = vadd.f32 %v469, %v470
      %v472 = vrot.slane %v471, 1
      %v473 = vadd.f32 %v471, %v472
      %v474 = vadd.f32 %v411, %v414
      %v475 = vadd.f32 %v474, %v417
      %v476 = vadd.f32 %v475, %v420
      %v477 = vadd.f32 %v476, %v423
      %v478 = vadd.f32 %v477, %v426
      %v479 = vrot.slane %v478, 4
      %v480 = vadd.f32 %v478, %v479
      %v481 = vrot.slane %v480, 2
      %v482 = vadd.f32 %v480, %v481
      %v483 = vrot.slane %v482, 1
      %v484 = vadd.f32 %v482, %v483
      %v485 = vadd.f32 %v429, %v432
      %v486 = vadd.f32 %v485, %v435
      %v487 = vadd.f32 %v486, %v438
      %v488 = vadd.f32 %v487, %v441
      %v489 = vadd.f32 %v488, %v444
      %v490 = vrot.slane %v489, 4
      %v491 = vadd.f32 %v489, %v490
      %v492 = vrot.slane %v491, 2
      %v493 = vadd.f32 %v491, %v492
      %v494 = vrot.slane %v493, 1
      %v495 = vadd.f32 %v493, %v494
      %v496 = vadd.f32 %v447, %v450
      %v497 = vadd.f32 %v496, %v453
      %v498 = vadd.f32 %v497, %v456
      %v499 = vadd.f32 %v498, %v459
      %v500 = vadd.f32 %v499, %v462
      %v501 = vrot.slane %v500, 4
      %v502 = vadd.f32 %v500, %v501
      %v503 = vrot.slane %v502, 2
      %v504 = vadd.f32 %v502, %v503
      %v505 = vrot.slane %v504, 1
      %v506 = vadd.f32 %v504, %v505
      %v507 = vmul.f32 %v333, 0.00043402778
      %v508 = vmul.f32 %v344, 0.00043402778
      %v509 = vmul.f32 %v355, 0.00043402778
      %v510 = vmul.f32 %v366, 0.00043402778
      %v511 = vmul.f32 %v473, 0.00043402778
      %v512 = vmul.f32 %v484, 0.00043402778
      %v513 = vmul.f32 %v495, 0.00043402778
      %v514 = vmul.f32 %v506, 0.00043402778
      %v515 = vmul.f32 %v507, %v507
      %v516 = vmul.f32 %v508, %v508
      %v517 = vmul.f32 %v509, %v509
      %v518 = vmul.f32 %v510, %v510
      %v519 = vsub.f32 %v511, %v515
      %v520 = vsub.f32 %v512, %v516
      %v521 = vsub.f32 %v513, %v517
      %v522 = vsub.f32 %v514, %v518
      %v523 = vadd.f32 %v519, 0.001
      %v524 = vadd.f32 %v520, 0.001
      %v525 = vadd.f32 %v521, 0.001
      %v526 = vadd.f32 %v522, 0.001
      %v527 = vrsqrt.pop %v523
      %v528 = vrsqrt.pop %v524
      %v529 = vrsqrt.pop %v525
      %v530 = vrsqrt.pop %v526
      %v531 = vmul.f32 %v527, 3.0
      %v532 = vmul.f32 %v528, 3.0
      %v533 = vmul.f32 %v529, 3.0
      %v534 = vmul.f32 %v530, 3.0
      %v535 = vsub.f32 %v226, %v507
      %v536 = vsub.f32 %v227, %v507
      %v537 = vsub.f32 %v228, %v507
      %v538 = vsub.f32 %v229, %v507
      %v539 = vsub.f32 %v230, %v507
      %v540 = vsub.f32 %v231, %v507
      %v541 = vsub.f32 %v232, %v508
      %v542 = vsub.f32 %v233, %v508
      %v543 = vsub.f32 %v234, %v508
      %v544 = vsub.f32 %v235, %v508
      %v545 = vsub.f32 %v236, %v508
      %v546 = vsub.f32 %v237, %v508
      %v547 = vsub.f32 %v238, %v509
      %v548 = vsub.f32 %v239, %v509
      %v549 = vsub.f32 %v240, %v509
      %v550 = vsub.f32 %v241, %v509
      %v551 = vsub.f32 %v242, %v509
      %v552 = vsub.f32 %v243, %v509
      %v553 = vsub.f32 %v244, %v510
      %v554 = vsub.f32 %v245, %v510
      %v555 = vsub.f32 %v246, %v510
      %v556 = vsub.f32 %v247, %v510
      %v557 = vsub.f32 %v248, %v510
      %v558 = vsub.f32 %v249, %v510
      %v559 = vmul.f32 %v535, %v531
      %v560 = vmul.f32 %v536, %v531
      %v561 = vmul.f32 %v537, %v531
      %v562 = vmul.f32 %v538, %v531
      %v563 = vmul.f32 %v539, %v531
      %v564 = vmul.f32 %v540, %v531
      %v565 = vmul.f32 %v541, %v532
      %v566 = vmul.f32 %v542, %v532
      %v567 = vmul.f32 %v543, %v532
      %v568 = vmul.f32 %v544, %v532
      %v569 = vmul.f32 %v545, %v532
      %v570 = vmul.f32 %v546, %v532
      %v571 = vmul.f32 %v547, %v533
      %v572 = vmul.f32 %v548, %v533
      %v573 = vmul.f32 %v549, %v533
      %v574 = vmul.f32 %v550, %v533
      %v575 = vmul.f32 %v551, %v533
      %v576 = vmul.f32 %v552, %v533
      %v577 = vmul.f32 %v553, %v534
      %v578 = vmul.f32 %v554, %v534
      %v579 = vmul.f32 %v555, %v534
      %v580 = vmul.f32 %v556, %v534
      %v581 = vmul.f32 %v557, %v534
      %v582 = vmul.f32 %v558, %v534
      %v583 = vsel %vm250, %v559, -inf
      %v584 = vsel %vm250, %v565, -inf
      %v585 = vmax.f32 %v583, %v584
      %v586 = vsel %vm250, %v571, -inf
      %v587 = vmax.f32 %v585, %v586
      %v588 = vsel %vm250, %v577, -inf
      %v589 = vmax.f32 %v587, %v588
      %v590 = vsel %vm250, %v560, -inf
      %v591 = vsel %vm250, %v566, -inf
      %v592 = vmax.f32 %v590, %v591
      %v593 = vsel %vm250, %v572, -inf
      %v594 = vmax.f32 %v592, %v593
      %v595 = vsel %vm250, %v578, -inf
      %v596 = vmax.f32 %v594, %v595
      %v597 = vsel %vm250, %v561, -inf
      %v598 = vsel %vm250, %v567, -inf
      %v599 = vmax.f32 %v597, %v598
      %v600 = vsel %vm250, %v573, -inf
      %v601 = vmax.f32 %v599, %v600
      %v602 = vsel %vm250, %v579, -inf
      %v603 = vmax.f32 %v601, %v602
      %v604 = vsel %vm250, %v562, -inf
      %v605 = vsel %vm250, %v568, -inf
      %v606 = vmax.f32 %v604, %v605
      %v607 = vsel %vm250, %v574, -inf
      %v608 = vmax.f32 %v606, %v607
      %v609 = vsel %vm250, %v580, -inf
      %v610 = vmax.f32 %v608, %v609
      %v611 = vsel %vm250, %v563, -inf
      %v612 = vsel %vm250, %v569, -inf
      %v613 = vmax.f32 %v611, %v612
      %v614 = vsel %vm250, %v575, -inf
      %v615 = vmax.f32 %v613, %v614
      %v616 = vsel %vm250, %v581, -inf
      %v617 = vmax.f32 %v615, %v616
      %v618 = vsel %vm250, %v564, -inf
      %v619 = vsel %vm250, %v570, -inf
      %v620 = vmax.f32 %v618, %v619
      %v621 = vsel %vm250, %v576, -inf
      %v622 = vmax.f32 %v620, %v621
      %v623 = vsel %vm250, %v582, -inf
      %v624 = vmax.f32 %v622, %v623
      %631 = vrot.lane.b32.xlu0 %v589, 127
      %v632 = vpop.permute.xlu0 %631
      %633 = vrot.lane.b32.xlu0 %v596, 127
      %v634 = vpop.permute.xlu0 %633
      %635 = vrot.lane.b32.xlu0 %v603, 127
      %v636 = vpop.permute.xlu0 %635
      %637 = vrot.lane.b32.xlu0 %v610, 127
      %v638 = vpop.permute.xlu0 %637
      %639 = vrot.lane.b32.xlu0 %v617, 127
      %v640 = vpop.permute.xlu0 %639
      %641 = vrot.lane.b32.xlu0 %v624, 127
      %v642 = vpop.permute.xlu0 %641
      %vm649 = vcmask 384000
      %v650 = vsel %vm649, %v632, -inf
      %v651 = vsel %vm649, %v634, -inf
      %v652 = vsel %vm649, %v636, -inf
      %v653 = vsel %vm649, %v638, -inf
      %v654 = vsel %vm649, %v640, -inf
      %v655 = vsel %vm649, %v642, -inf
      %v656 = vmax.f32 %v589, %v650
      %v657 = vmax.f32 %v596, %v651
      %v658 = vmax.f32 %v603, %v652
      %v659 = vmax.f32 %v610, %v653
      %v660 = vmax.f32 %v617, %v654
      %v661 = vmax.f32 %v624, %v655
      %668 = vrot.lane.b32.xlu0 %v656, 126
      %v669 = vpop.permute.xlu0 %668
      %670 = vrot.lane.b32.xlu0 %v657, 126
      %v671 = vpop.permute.xlu0 %670
      %672 = vrot.lane.b32.xlu0 %v658, 126
      %v673 = vpop.permute.xlu0 %672
      %674 = vrot.lane.b32.xlu0 %v659, 126
      %v675 = vpop.permute.xlu0 %674
      %676 = vrot.lane.b32.xlu0 %v660, 126
      %v677 = vpop.permute.xlu0 %676
      %678 = vrot.lane.b32.xlu0 %v661, 126
      %v679 = vpop.permute.xlu0 %678
      %vm686 = vcmask 375808
      %v687 = vsel %vm686, %v669, -inf
      %v688 = vsel %vm686, %v671, -inf
      %v689 = vsel %vm686, %v673, -inf
      %v690 = vsel %vm686, %v675, -inf
      %v691 = vsel %vm686, %v677, -inf
      %v692 = vsel %vm686, %v679, -inf
      %v693 = vmax.f32 %v656, %v687
      %v694 = vmax.f32 %v657, %v688
      %v695 = vmax.f32 %v658, %v689
      %v696 = vmax.f32 %v659, %v690
      %v697 = vmax.f32 %v660, %v691
      %v698 = vmax.f32 %v661, %v692
      %705 = vrot.lane.b32.xlu0 %v693, 124
      %v706 = vpop.permute.xlu0 %705
      %707 = vrot.lane.b32.xlu0 %v694, 124
      %v708 = vpop.permute.xlu0 %707
      %709 = vrot.lane.b32.xlu0 %v695, 124
      %v710 = vpop.permute.xlu0 %709
      %711 = vrot.lane.b32.xlu0 %v696, 124
      %v712 = vpop.permute.xlu0 %711
      %713 = vrot.lane.b32.xlu0 %v697, 124
      %v714 = vpop.permute.xlu0 %713
      %715 = vrot.lane.b32.xlu0 %v698, 124
      %v716 = vpop.permute.xlu0 %715
      %vm723 = vcmask 359424
      %v724 = vsel %vm723, %v706, -inf
      %v725 = vsel %vm723, %v708, -inf
      %v726 = vsel %vm723, %v710, -inf
      %v727 = vsel %vm723, %v712, -inf
      %v728 = vsel %vm723, %v714, -inf
      %v729 = vsel %vm723, %v716, -inf
      %v730 = vmax.f32 %v693, %v724
      %v731 = vmax.f32 %v694, %v725
      %v732 = vmax.f32 %v695, %v726
      %v733 = vmax.f32 %v696, %v727
      %v734 = vmax.f32 %v697, %v728
      %v735 = vmax.f32 %v698, %v729
      %736 = vrot.lane.b32.xlu0 %v589, 1
      %v737 = vpop.permute.xlu0 %736
      %738 = vrot.lane.b32.xlu0 %v596, 1
      %v739 = vpop.permute.xlu0 %738
      %740 = vrot.lane.b32.xlu0 %v603, 1
      %v741 = vpop.permute.xlu0 %740
      %742 = vrot.lane.b32.xlu0 %v610, 1
      %v743 = vpop.permute.xlu0 %742
      %744 = vrot.lane.b32.xlu0 %v617, 1
      %v745 = vpop.permute.xlu0 %744
      %746 = vrot.lane.b32.xlu0 %v624, 1
      %v747 = vpop.permute.xlu0 %746
      %vm754 = vcmask 7168
      %v755 = vsel %vm754, -inf, %v737
      %v756 = vsel %vm754, -inf, %v739
      %v757 = vsel %vm754, -inf, %v741
      %v758 = vsel %vm754, -inf, %v743
      %v759 = vsel %vm754, -inf, %v745
      %v760 = vsel %vm754, -inf, %v747
      %v761 = vmax.f32 %v589, %v755
      %v762 = vmax.f32 %v596, %v756
      %v763 = vmax.f32 %v603, %v757
      %v764 = vmax.f32 %v610, %v758
      %v765 = vmax.f32 %v617, %v759
      %v766 = vmax.f32 %v624, %v760
      %773 = vrot.lane.b32.xlu0 %v761, 2
      %v774 = vpop.permute.xlu0 %773
      %775 = vrot.lane.b32.xlu0 %v762, 2
      %v776 = vpop.permute.xlu0 %775
      %777 = vrot.lane.b32.xlu0 %v763, 2
      %v778 = vpop.permute.xlu0 %777
      %779 = vrot.lane.b32.xlu0 %v764, 2
      %v780 = vpop.permute.xlu0 %779
      %781 = vrot.lane.b32.xlu0 %v765, 2
      %v782 = vpop.permute.xlu0 %781
      %783 = vrot.lane.b32.xlu0 %v766, 2
      %v784 = vpop.permute.xlu0 %783
      %vm791 = vcmask 15360
      %v792 = vsel %vm791, -inf, %v774
      %v793 = vsel %vm791, -inf, %v776
      %v794 = vsel %vm791, -inf, %v778
      %v795 = vsel %vm791, -inf, %v780
      %v796 = vsel %vm791, -inf, %v782
      %v797 = vsel %vm791, -inf, %v784
      %v798 = vmax.f32 %v761, %v792
      %v799 = vmax.f32 %v762, %v793
      %v800 = vmax.f32 %v763, %v794
      %v801 = vmax.f32 %v764, %v795
      %v802 = vmax.f32 %v765, %v796
      %v803 = vmax.f32 %v766, %v797
      %810 = vrot.lane.b32.xlu0 %v798, 4
      %v811 = vpop.permute.xlu0 %810
      %812 = vrot.lane.b32.xlu0 %v799, 4
      %v813 = vpop.permute.xlu0 %812
      %814 = vrot.lane.b32.xlu0 %v800, 4
      %v815 = vpop.permute.xlu0 %814
      %816 = vrot.lane.b32.xlu0 %v801, 4
      %v817 = vpop.permute.xlu0 %816
      %818 = vrot.lane.b32.xlu0 %v802, 4
      %v819 = vpop.permute.xlu0 %818
      %820 = vrot.lane.b32.xlu0 %v803, 4
      %v821 = vpop.permute.xlu0 %820
      %vm828 = vcmask 31744
      %v829 = vsel %vm828, -inf, %v811
      %v830 = vsel %vm828, -inf, %v813
      %v831 = vsel %vm828, -inf, %v815
      %v832 = vsel %vm828, -inf, %v817
      %v833 = vsel %vm828, -inf, %v819
      %v834 = vsel %vm828, -inf, %v821
      %v835 = vmax.f32 %v798, %v829
      %v836 = vmax.f32 %v799, %v830
      %v837 = vmax.f32 %v800, %v831
      %v838 = vmax.f32 %v801, %v832
      %v839 = vmax.f32 %v802, %v833
      %v840 = vmax.f32 %v803, %v834
      %v841 = vmax.f32 %v730, %v835
      %v842 = vmax.f32 %v731, %v836
      %v843 = vmax.f32 %v732, %v837
      %v844 = vmax.f32 %v733, %v838
      %v845 = vmax.f32 %v734, %v839
      %v846 = vmax.f32 %v735, %v840
      %vm853 = vcmask 1046528
      %v854 = vrot.slane %v841, 1
      %v855 = vrot.slane %v842, 1
      %v856 = vsel %vm853, %v854, %v855
      %v857 = vrot.slane %v843, 1
      %v858 = vsel %vm853, %v855, %v857
      %v859 = vrot.slane %v844, 1
      %v860 = vsel %vm853, %v857, %v859
      %v861 = vrot.slane %v845, 1
      %v862 = vsel %vm853, %v859, %v861
      %v863 = vrot.slane %v846, 1
      %v864 = vsel %vm853, %v861, %v863
      %v871 = vsel %vm853, %v863, -inf
      %v872 = vmax.f32 %v841, %v856
      %v873 = vmax.f32 %v842, %v858
      %v874 = vmax.f32 %v843, %v860
      %v875 = vmax.f32 %v844, %v862
      %v876 = vmax.f32 %v845, %v864
      %v877 = vmax.f32 %v846, %v871
      %vm884 = vcmask 1045504
      %v885 = vrot.slane %v872, 2
      %v886 = vrot.slane %v873, 2
      %v887 = vsel %vm884, %v885, %v886
      %v888 = vrot.slane %v874, 2
      %v889 = vsel %vm884, %v886, %v888
      %v890 = vrot.slane %v875, 2
      %v891 = vsel %vm884, %v888, %v890
      %v892 = vrot.slane %v876, 2
      %v893 = vsel %vm884, %v890, %v892
      %v894 = vrot.slane %v877, 2
      %v895 = vsel %vm884, %v892, %v894
      %v902 = vsel %vm884, %v894, -inf
      %v903 = vmax.f32 %v872, %v887
      %v904 = vmax.f32 %v873, %v889
      %v905 = vmax.f32 %v874, %v891
      %v906 = vmax.f32 %v875, %v893
      %v907 = vmax.f32 %v876, %v895
      %v908 = vmax.f32 %v877, %v902
      %vm915 = vcmask 1043456
      %v916 = vrot.slane %v903, 4
      %v917 = vrot.slane %v904, 4
      %v918 = vsel %vm915, %v916, %v917
      %v919 = vrot.slane %v905, 4
      %v920 = vsel %vm915, %v917, %v919
      %v921 = vrot.slane %v906, 4
      %v922 = vsel %vm915, %v919, %v921
      %v923 = vrot.slane %v907, 4
      %v924 = vsel %vm915, %v921, %v923
      %v925 = vrot.slane %v908, 4
      %v926 = vsel %vm915, %v923, %v925
      %v933 = vsel %vm915, %v925, -inf
      %v934 = vmax.f32 %v903, %v918
      %v935 = vmax.f32 %v904, %v920
      %v936 = vmax.f32 %v905, %v922
      %v937 = vmax.f32 %v906, %v924
      %v938 = vmax.f32 %v907, %v926
      %v939 = vmax.f32 %v908, %v933
      %vm940 = vcmask 1040384
      %v941 = vrot.slane %v841, 7
      %v942 = vrot.slane %v842, 7
      %v943 = vsel %vm940, %v941, %v942
      %v944 = vrot.slane %v843, 7
      %v945 = vsel %vm940, %v942, %v944
      %v946 = vrot.slane %v844, 7
      %v947 = vsel %vm940, %v944, %v946
      %v948 = vrot.slane %v845, 7
      %v949 = vsel %vm940, %v946, %v948
      %v950 = vrot.slane %v846, 7
      %v951 = vsel %vm940, %v948, %v950
      %v958 = vsel %vm940, -inf, %v941
      %v959 = vmax.f32 %v841, %v958
      %v960 = vmax.f32 %v842, %v943
      %v961 = vmax.f32 %v843, %v945
      %v962 = vmax.f32 %v844, %v947
      %v963 = vmax.f32 %v845, %v949
      %v964 = vmax.f32 %v846, %v951
      %vm971 = vcmask 1041408
      %v972 = vrot.slane %v959, 6
      %v973 = vrot.slane %v960, 6
      %v974 = vsel %vm971, %v972, %v973
      %v975 = vrot.slane %v961, 6
      %v976 = vsel %vm971, %v973, %v975
      %v977 = vrot.slane %v962, 6
      %v978 = vsel %vm971, %v975, %v977
      %v979 = vrot.slane %v963, 6
      %v980 = vsel %vm971, %v977, %v979
      %v981 = vrot.slane %v964, 6
      %v982 = vsel %vm971, %v979, %v981
      %v989 = vsel %vm971, -inf, %v972
      %v990 = vmax.f32 %v959, %v989
      %v991 = vmax.f32 %v960, %v974
      %v992 = vmax.f32 %v961, %v976
      %v993 = vmax.f32 %v962, %v978
      %v994 = vmax.f32 %v963, %v980
      %v995 = vmax.f32 %v964, %v982
      %v1002 = vrot.slane %v990, 4
      %v1003 = vrot.slane %v991, 4
      %v1004 = vsel %vm915, %v1002, %v1003
      %v1005 = vrot.slane %v992, 4
      %v1006 = vsel %vm915, %v1003, %v1005
      %v1007 = vrot.slane %v993, 4
      %v1008 = vsel %vm915, %v1005, %v1007
      %v1009 = vrot.slane %v994, 4
      %v1010 = vsel %vm915, %v1007, %v1009
      %v1011 = vrot.slane %v995, 4
      %v1012 = vsel %vm915, %v1009, %v1011
      %v1019 = vsel %vm915, -inf, %v1002
      %v1020 = vmax.f32 %v990, %v1019
      %v1021 = vmax.f32 %v991, %v1004
      %v1022 = vmax.f32 %v992, %v1006
      %v1023 = vmax.f32 %v993, %v1008
      %v1024 = vmax.f32 %v994, %v1010
      %v1025 = vmax.f32 %v995, %v1012
      %v1026 = vmax.f32 %v934, %v1020
      %v1027 = vmax.f32 %v935, %v1021
      %v1028 = vmax.f32 %v936, %v1022
      %v1029 = vmax.f32 %v937, %v1023
      %v1030 = vmax.f32 %v938, %v1024
      %v1031 = vmax.f32 %v939, %v1025
      %v1032 = vsub.f32 %v559, %v1026
      %v1033 = vsub.f32 %v560, %v1027
      %v1034 = vsub.f32 %v561, %v1028
      %v1035 = vsub.f32 %v562, %v1029
      %v1036 = vsub.f32 %v563, %v1030
      %v1037 = vsub.f32 %v564, %v1031
      %v1038 = vsub.f32 %v565, %v1026
      %v1039 = vsub.f32 %v566, %v1027
      %v1040 = vsub.f32 %v567, %v1028
      %v1041 = vsub.f32 %v568, %v1029
      %v1042 = vsub.f32 %v569, %v1030
      %v1043 = vsub.f32 %v570, %v1031
      %v1044 = vsub.f32 %v571, %v1026
      %v1045 = vsub.f32 %v572, %v1027
      %v1046 = vsub.f32 %v573, %v1028
      %v1047 = vsub.f32 %v574, %v1029
      %v1048 = vsub.f32 %v575, %v1030
      %v1049 = vsub.f32 %v576, %v1031
      %v1050 = vsub.f32 %v577, %v1026
      %v1051 = vsub.f32 %v578, %v1027
      %v1052 = vsub.f32 %v579, %v1028
      %v1053 = vsub.f32 %v580, %v1029
      %v1054 = vsub.f32 %v581, %v1030
      %v1055 = vsub.f32 %v582, %v1031
      %v1056 = vmul.f32 %v1032, 1.442695
      %v1057 = vpow.pop %v1056
      %v1058 = vmul.f32 %v1033, 1.442695
      %v1059 = vpow.pop %v1058
      %v1060 = vmul.f32 %v1034, 1.442695
      %v1061 = vpow.pop %v1060
      %v1062 = vmul.f32 %v1035, 1.442695
      %v1063 = vpow.pop %v1062
      %v1064 = vmul.f32 %v1036, 1.442695
      %v1065 = vpow.pop %v1064
      %v1066 = vmul.f32 %v1037, 1.442695
      %v1067 = vpow.pop %v1066
      %v1068 = vmul.f32 %v1038, 1.442695
      %v1069 = vpow.pop %v1068
      %v1070 = vmul.f32 %v1039, 1.442695
      %v1071 = vpow.pop %v1070
      %v1072 = vmul.f32 %v1040, 1.442695
      %v1073 = vpow.pop %v1072
      %v1074 = vmul.f32 %v1041, 1.442695
      %v1075 = vpow.pop %v1074
      %v1076 = vmul.f32 %v1042, 1.442695
      %v1077 = vpow.pop %v1076
      %v1078 = vmul.f32 %v1043, 1.442695
      %v1079 = vpow.pop %v1078
      %v1080 = vmul.f32 %v1044, 1.442695
      %v1081 = vpow.pop %v1080
      %v1082 = vmul.f32 %v1045, 1.442695
      %v1083 = vpow.pop %v1082
      %v1084 = vmul.f32 %v1046, 1.442695
      %v1085 = vpow.pop %v1084
      %v1086 = vmul.f32 %v1047, 1.442695
      %v1087 = vpow.pop %v1086
      %v1088 = vmul.f32 %v1048, 1.442695
      %v1089 = vpow.pop %v1088
      %v1090 = vmul.f32 %v1049, 1.442695
      %v1091 = vpow.pop %v1090
      %v1092 = vmul.f32 %v1050, 1.442695
      %v1093 = vpow.pop %v1092
      %v1094 = vmul.f32 %v1051, 1.442695
      %v1095 = vpow.pop %v1094
      %v1096 = vmul.f32 %v1052, 1.442695
      %v1097 = vpow.pop %v1096
      %v1098 = vmul.f32 %v1053, 1.442695
      %v1099 = vpow.pop %v1098
      %v1100 = vmul.f32 %v1054, 1.442695
      %v1101 = vpow.pop %v1100
      %v1102 = vmul.f32 %v1055, 1.442695
      %v1103 = vpow.pop %v1102
      %v1104 = vsel %vm250, %v1057, 0.0
      %v1105 = vsel %vm250, %v1069, 0.0
      %v1106 = vadd.f32 %v1104, %v1105
      %v1107 = vsel %vm250, %v1081, 0.0
      %v1108 = vadd.f32 %v1106, %v1107
      %v1109 = vsel %vm250, %v1093, 0.0
      %v1110 = vadd.f32 %v1108, %v1109
      %v1111 = vsel %vm250, %v1059, 0.0
      %v1112 = vsel %vm250, %v1071, 0.0
      %v1113 = vadd.f32 %v1111, %v1112
      %v1114 = vsel %vm250, %v1083, 0.0
      %v1115 = vadd.f32 %v1113, %v1114
      %v1116 = vsel %vm250, %v1095, 0.0
      %v1117 = vadd.f32 %v1115, %v1116
      %v1118 = vsel %vm250, %v1061, 0.0
      %v1119 = vsel %vm250, %v1073, 0.0
      %v1120 = vadd.f32 %v1118, %v1119
      %v1121 = vsel %vm250, %v1085, 0.0
      %v1122 = vadd.f32 %v1120, %v1121
      %v1123 = vsel %vm250, %v1097, 0.0
      %v1124 = vadd.f32 %v1122, %v1123
      %v1125 = vsel %vm250, %v1063, 0.0
      %v1126 = vsel %vm250, %v1075, 0.0
      %v1127 = vadd.f32 %v1125, %v1126
      %v1128 = vsel %vm250, %v1087, 0.0
      %v1129 = vadd.f32 %v1127, %v1128
      %v1130 = vsel %vm250, %v1099, 0.0
      %v1131 = vadd.f32 %v1129, %v1130
      %v1132 = vsel %vm250, %v1065, 0.0
      %v1133 = vsel %vm250, %v1077, 0.0
      %v1134 = vadd.f32 %v1132, %v1133
      %v1135 = vsel %vm250, %v1089, 0.0
      %v1136 = vadd.f32 %v1134, %v1135
      %v1137 = vsel %vm250, %v1101, 0.0
      %v1138 = vadd.f32 %v1136, %v1137
      %v1139 = vsel %vm250, %v1067, 0.0
      %v1140 = vsel %vm250, %v1079, 0.0
      %v1141 = vadd.f32 %v1139, %v1140
      %v1142 = vsel %vm250, %v1091, 0.0
      %v1143 = vadd.f32 %v1141, %v1142
      %v1144 = vsel %vm250, %v1103, 0.0
      %v1145 = vadd.f32 %v1143, %v1144
      %v1146 = vld [vmem:[%s1] sm:$0xff]
      %v1147 = vld [vmem:[%s1 + $0x8] sm:$0xff]
      %v1148 = vld [vmem:[%s1 + $0x10] sm:$0xff]
      %v1149 = vld [vmem:[%s1 + $0x18] sm:$0xff]
      %v1150 = vld [vmem:[%s1 + $0x20] sm:$0xff]
      %v1151 = vld [vmem:[%s1 + $0x28] sm:$0xff]
      %v1152 = vld [vmem:[%s2] sm:$0xff]
      %v1153 = vld [vmem:[%s2 + $0x8] sm:$0xff]
      %v1154 = vld [vmem:[%s2 + $0x10] sm:$0xff]
      %v1155 = vld [vmem:[%s2 + $0x18] sm:$0xff]
      %v1156 = vld [vmem:[%s2 + $0x20] sm:$0xff]
      %v1157 = vld [vmem:[%s2 + $0x28] sm:$0xff]
      %v1159 = vsel %vm250, %v1110, 0
      %v1162 = vsel %vm250, %v1117, 0
      %v1165 = vsel %vm250, %v1124, 0
      %v1168 = vsel %vm250, %v1131, 0
      %v1171 = vsel %vm250, %v1138, 0
      %v1174 = vsel %vm250, %v1145, 0
      %1176 = vmatprep.subr.mxu0 0.0
      %1177 = vmatpush1.msra.mxu0 %v1152
      %1178 = vmatprep.subr.mxu0 0.0
      %1179 = vmatpush1.msra.mxu0 %v1153
      %1180 = vmatprep.subr.mxu0 0.0
      %1181 = vmatpush1.msra.mxu0 %v1154
      %1182 = vmatprep.subr.mxu0 0.0
      %1183 = vmatpush1.msra.mxu0 %v1155
      %1184 = vmatprep.subr.mxu0 0.0
      %1185 = vmatpush1.msra.mxu0 %v1156
      %1186 = vmatprep.subr.mxu0 0.0
      %1187 = vmatpush1.msra.mxu0 %v1157
      %1188 = vmatprep.subr.mxu0 0.0
      %1189 = vmatpush1.msra.mxu0 0.0
      %1190 = vmatprep.subr.mxu0 0.0
      %1191 = vmatpush1.msra.mxu0 0.0
      %1192 = vmatprep.subr.mxu0 0.0
      %1193 = vmatpush1.msra.mxu0 0.0
      %1194 = vmatprep.subr.mxu0 0.0
      %1195 = vmatpush1.msra.mxu0 0.0
      %1196 = vmatprep.subr.mxu0 0.0
      %1197 = vmatpush1.msra.mxu0 0.0
      %1198 = vmatprep.subr.mxu0 0.0
      %1199 = vmatpush1.msra.mxu0 0.0
      %1200 = vmatprep.subr.mxu0 0.0
      %1201 = vmatpush1.msra.mxu0 0.0
      %1202 = vmatprep.subr.mxu0 0.0
      %1203 = vmatpush1.msra.mxu0 0.0
      %1204 = vmatprep.subr.mxu0 0.0
      %1205 = vmatpush1.msra.mxu0 0.0
      %1206 = vmatprep.subr.mxu0 0.0
      %1207 = vmatpush1.msra.mxu0 0.0
      %1208 = vmatprep.subr.mxu0 0.0
      %1209 = vmatpush1.msra.mxu0 0.0
      %1210 = vmatprep.subr.mxu0 0.0
      %1211 = vmatpush1.msra.mxu0 0.0
      %1212 = vmatprep.subr.mxu0 0.0
      %1213 = vmatpush1.msra.mxu0 0.0
      %1214 = vmatprep.subr.mxu0 0.0
      %1215 = vmatpush1.msra.mxu0 0.0
      %1216 = vmatprep.subr.mxu0 0.0
      %1217 = vmatpush1.msra.mxu0 0.0
      %1218 = vmatprep.subr.mxu0 0.0
      %1219 = vmatpush1.msra.mxu0 0.0
      %1220 = vmatprep.subr.mxu0 0.0
      %1221 = vmatpush1.msra.mxu0 0.0
      %1222 = vmatprep.subr.mxu0 0.0
      %1223 = vmatpush1.msra.mxu0 0.0
      %1224 = vmatprep.subr.mxu0 0.0
      %1225 = vmatpush1.msra.mxu0 0.0
      %1226 = vmatprep.subr.mxu0 0.0
      %1227 = vmatpush1.msra.mxu0 0.0
      %1228 = vmatprep.subr.mxu0 0.0
      %1229 = vmatpush1.msra.mxu0 0.0
      %1230 = vmatprep.subr.mxu0 0.0
      %1231 = vmatpush1.msra.mxu0 0.0
      %1232 = vmatprep.subr.mxu0 0.0
      %1233 = vmatpush1.msra.mxu0 0.0
      %1234 = vmatprep.subr.mxu0 0.0
      %1235 = vmatpush1.msra.mxu0 0.0
      %1236 = vmatprep.subr.mxu0 0.0
      %1237 = vmatpush1.msra.mxu0 0.0
      %1238 = vmatprep.subr.mxu0 0.0
      %1239 = vmatpush1.msra.mxu0 0.0
      %1240 = vmatprep.mubr.f32.mxu0 0.0
      %1241 = vmatmul.mubr.f32.gmra.mrb[0].mxu0 %v1159
      %v1242 = vpop.f32.mrb[0].mxu0
      %v1243 = vadd.f32 0.0, %v1242
      %v1244 = vpop.f32.mrb[0].mxu0
      %1245 = vmatprep.mubr.f32.mxu0 0.0
      %1246 = vmatmul.mubr.f32.gmra.mrb[0].mxu0 %v1162
      %v1247 = vpop.f32.mrb[0].mxu0
      %v1248 = vadd.f32 0.0, %v1247
      %v1249 = vpop.f32.mrb[0].mxu0
      %1250 = vmatprep.mubr.f32.mxu0 0.0
      %1251 = vmatmul.mubr.f32.gmra.mrb[0].mxu0 %v1165
      %v1252 = vpop.f32.mrb[0].mxu0
      %v1253 = vadd.f32 0.0, %v1252
      %v1254 = vpop.f32.mrb[0].mxu0
      %1255 = vmatprep.mubr.f32.mxu0 0.0
      %1256 = vmatmul.mubr.f32.gmra.mrb[0].mxu0 %v1168
      %v1257 = vpop.f32.mrb[0].mxu0
      %v1258 = vadd.f32 0.0, %v1257
      %v1259 = vpop.f32.mrb[0].mxu0
      %1260 = vmatprep.mubr.f32.mxu0 0.0
      %1261 = vmatmul.mubr.f32.gmra.mrb[0].mxu0 %v1171
      %v1262 = vpop.f32.mrb[0].mxu0
      %v1263 = vadd.f32 0.0, %v1262
      %v1264 = vpop.f32.mrb[0].mxu0
      %1265 = vmatprep.mubr.f32.mxu0 0.0
      %1266 = vmatmul.mubr.f32.gmra.mrb[0].mxu0 %v1174
      %v1267 = vpop.f32.mrb[0].mxu0
      %v1268 = vadd.f32 0.0, %v1267
      %v1269 = vpop.f32.mrb[0].mxu0
      %1270 = vdwg.mxu0
      %s1271 = sld [smem:[#allocation2]]
      %v1272 = vstv %s1271
      %v1274 = vsel %vm250, %v1146, 0
      %v1277 = vsel %vm250, %v1147, 0
      %v1280 = vsel %vm250, %v1148, 0
      %v1283 = vsel %vm250, %v1149, 0
      %v1286 = vsel %vm250, %v1150, 0
      %v1289 = vsel %vm250, %v1151, 0
      %1291 = vmatprep.subr.mxu0 0.0
      %1292 = vmatpush1.msra.mxu0 %v1243
      %1293 = vmatprep.subr.mxu0 0.0
      %1294 = vmatpush1.msra.mxu0 %v1248
      %1295 = vmatprep.subr.mxu0 0.0
      %1296 = vmatpush1.msra.mxu0 %v1253
      %1297 = vmatprep.subr.mxu0 0.0
      %1298 = vmatpush1.msra.mxu0 %v1258
      %1299 = vmatprep.subr.mxu0 0.0
      %1300 = vmatpush1.msra.mxu0 %v1263
      %1301 = vmatprep.subr.mxu0 0.0
      %1302 = vmatpush1.msra.mxu0 %v1268
      %1303 = vmatprep.subr.mxu0 0.0
      %1304 = vmatpush1.msra.mxu0 0.0
      %1305 = vmatprep.subr.mxu0 0.0
      %1306 = vmatpush1.msra.mxu0 0.0
      %1307 = vmatprep.subr.mxu0 0.0
      %1308 = vmatpush1.msra.mxu0 0.0
      %1309 = vmatprep.subr.mxu0 0.0
      %1310 = vmatpush1.msra.mxu0 0.0
      %1311 = vmatprep.subr.mxu0 0.0
      %1312 = vmatpush1.msra.mxu0 0.0
      %1313 = vmatprep.subr.mxu0 0.0
      %1314 = vmatpush1.msra.mxu0 0.0
      %1315 = vmatprep.subr.mxu0 0.0
      %1316 = vmatpush1.msra.mxu0 0.0
      %1317 = vmatprep.subr.mxu0 0.0
      %1318 = vmatpush1.msra.mxu0 0.0
      %1319 = vmatprep.subr.mxu0 0.0
      %1320 = vmatpush1.msra.mxu0 0.0
      %1321 = vmatprep.subr.mxu0 0.0
      %1322 = vmatpush1.msra.mxu0 0.0
      %1323 = vmatprep.subr.mxu0 0.0
      %1324 = vmatpush1.msra.mxu0 0.0
      %1325 = vmatprep.subr.mxu0 0.0
      %1326 = vmatpush1.msra.mxu0 0.0
      %1327 = vmatprep.subr.mxu0 0.0
      %1328 = vmatpush1.msra.mxu0 0.0
      %1329 = vmatprep.subr.mxu0 0.0
      %1330 = vmatpush1.msra.mxu0 0.0
      %1331 = vmatprep.subr.mxu0 0.0
      %1332 = vmatpush1.msra.mxu0 0.0
      %1333 = vmatprep.subr.mxu0 0.0
      %1334 = vmatpush1.msra.mxu0 0.0
      %1335 = vmatprep.subr.mxu0 0.0
      %1336 = vmatpush1.msra.mxu0 0.0
      %1337 = vmatprep.subr.mxu0 0.0
      %1338 = vmatpush1.msra.mxu0 0.0
      %1339 = vmatprep.subr.mxu0 0.0
      %1340 = vmatpush1.msra.mxu0 0.0
      %1341 = vmatprep.subr.mxu0 0.0
      %1342 = vmatpush1.msra.mxu0 0.0
      %1343 = vmatprep.subr.mxu0 0.0
      %1344 = vmatpush1.msra.mxu0 0.0
      %1345 = vmatprep.subr.mxu0 0.0
      %1346 = vmatpush1.msra.mxu0 0.0
      %1347 = vmatprep.subr.mxu0 0.0
      %1348 = vmatpush1.msra.mxu0 0.0
      %1349 = vmatprep.subr.mxu0 0.0
      %1350 = vmatpush1.msra.mxu0 0.0
      %1351 = vmatprep.subr.mxu0 0.0
      %1352 = vmatpush1.msra.mxu0 0.0
      %1353 = vmatprep.subr.mxu0 0.0
      %1354 = vmatpush1.msra.mxu0 0.0
      %1355 = vmatprep.mubr.f32.mxu0 0.0
      %1356 = vmatmul.mubr.f32.gmra.mrb[0].mxu0 %v1274
      %v1357 = vpop.f32.mrb[0].mxu0
      %v1358 = vadd.f32 %v1272, %v1357
      %v1359 = vpop.f32.mrb[0].mxu0
      %1360 = vmatprep.mubr.f32.mxu0 0.0
      %1361 = vmatmul.mubr.f32.gmra.mrb[0].mxu0 %v1277
      %v1362 = vpop.f32.mrb[0].mxu0
      %v1363 = vadd.f32 %v1272, %v1362
      %v1364 = vpop.f32.mrb[0].mxu0
      %1365 = vmatprep.mubr.f32.mxu0 0.0
      %1366 = vmatmul.mubr.f32.gmra.mrb[0].mxu0 %v1280
      %v1367 = vpop.f32.mrb[0].mxu0
      %v1368 = vadd.f32 %v1272, %v1367
      %v1369 = vpop.f32.mrb[0].mxu0
      %1370 = vmatprep.mubr.f32.mxu0 0.0
      %1371 = vmatmul.mubr.f32.gmra.mrb[0].mxu0 %v1283
      %v1372 = vpop.f32.mrb[0].mxu0
      %v1373 = vadd.f32 %v1272, %v1372
      %v1374 = vpop.f32.mrb[0].mxu0
      %1375 = vmatprep.mubr.f32.mxu0 0.0
      %1376 = vmatmul.mubr.f32.gmra.mrb[0].mxu0 %v1286
      %v1377 = vpop.f32.mrb[0].mxu0
      %v1378 = vadd.f32 %v1272, %v1377
      %v1379 = vpop.f32.mrb[0].mxu0
      %1380 = vmatprep.mubr.f32.mxu0 0.0
      %1381 = vmatmul.mubr.f32.gmra.mrb[0].mxu0 %v1289
      %v1382 = vpop.f32.mrb[0].mxu0
      %v1383 = vadd.f32 %v1272, %v1382
      %v1384 = vpop.f32.mrb[0].mxu0
      %1385 = vdwg.mxu0
      %v1386 = vadd.f32 %v1358, 1e-06
      %v1387 = vadd.f32 %v1363, 1e-06
      %v1388 = vadd.f32 %v1368, 1e-06
      %v1389 = vadd.f32 %v1373, 1e-06
      %v1390 = vadd.f32 %v1378, 1e-06
      %v1391 = vadd.f32 %v1383, 1e-06
      %v1392 = vrcp.pop %v1386
      %v1393 = vmul.f32 1.0, %v1392
      %v1394 = vrcp.pop %v1387
      %v1395 = vmul.f32 1.0, %v1394
      %v1396 = vrcp.pop %v1388
      %v1397 = vmul.f32 1.0, %v1396
      %v1398 = vrcp.pop %v1389
      %v1399 = vmul.f32 1.0, %v1398
      %v1400 = vrcp.pop %v1390
      %v1401 = vmul.f32 1.0, %v1400
      %v1402 = vrcp.pop %v1391
      %v1403 = vmul.f32 1.0, %v1402
      %v1404 = vmul.f32 %v1057, %v1393
      %v1405 = vmul.f32 %v1059, %v1395
      %v1406 = vmul.f32 %v1061, %v1397
      %v1407 = vmul.f32 %v1063, %v1399
      %v1408 = vmul.f32 %v1065, %v1401
      %v1409 = vmul.f32 %v1067, %v1403
      %v1410 = vmul.f32 %v1069, %v1393
      %v1411 = vmul.f32 %v1071, %v1395
      %v1412 = vmul.f32 %v1073, %v1397
      %v1413 = vmul.f32 %v1075, %v1399
      %v1414 = vmul.f32 %v1077, %v1401
      %v1415 = vmul.f32 %v1079, %v1403
      %v1416 = vmul.f32 %v1081, %v1393
      %v1417 = vmul.f32 %v1083, %v1395
      %v1418 = vmul.f32 %v1085, %v1397
      %v1419 = vmul.f32 %v1087, %v1399
      %v1420 = vmul.f32 %v1089, %v1401
      %v1421 = vmul.f32 %v1091, %v1403
      %v1422 = vmul.f32 %v1093, %v1393
      %v1423 = vmul.f32 %v1095, %v1395
      %v1424 = vmul.f32 %v1097, %v1397
      %v1425 = vmul.f32 %v1099, %v1399
      %v1426 = vmul.f32 %v1101, %v1401
      %v1427 = vmul.f32 %v1103, %v1403
      %v1428 = vsel %vm250, %v1404, -inf
      %v1429 = vsel %vm250, %v1410, -inf
      %v1430 = vmax.f32 %v1428, %v1429
      %v1431 = vsel %vm250, %v1416, -inf
      %v1432 = vmax.f32 %v1430, %v1431
      %v1433 = vsel %vm250, %v1422, -inf
      %v1434 = vmax.f32 %v1432, %v1433
      %v1435 = vsel %vm250, %v1405, -inf
      %v1436 = vsel %vm250, %v1411, -inf
      %v1437 = vmax.f32 %v1435, %v1436
      %v1438 = vsel %vm250, %v1417, -inf
      %v1439 = vmax.f32 %v1437, %v1438
      %v1440 = vsel %vm250, %v1423, -inf
      %v1441 = vmax.f32 %v1439, %v1440
      %v1442 = vsel %vm250, %v1406, -inf
      %v1443 = vsel %vm250, %v1412, -inf
      %v1444 = vmax.f32 %v1442, %v1443
      %v1445 = vsel %vm250, %v1418, -inf
      %v1446 = vmax.f32 %v1444, %v1445
      %v1447 = vsel %vm250, %v1424, -inf
      %v1448 = vmax.f32 %v1446, %v1447
      %v1449 = vsel %vm250, %v1407, -inf
      %v1450 = vsel %vm250, %v1413, -inf
      %v1451 = vmax.f32 %v1449, %v1450
      %v1452 = vsel %vm250, %v1419, -inf
      %v1453 = vmax.f32 %v1451, %v1452
      %v1454 = vsel %vm250, %v1425, -inf
      %v1455 = vmax.f32 %v1453, %v1454
      %v1456 = vsel %vm250, %v1408, -inf
      %v1457 = vsel %vm250, %v1414, -inf
      %v1458 = vmax.f32 %v1456, %v1457
      %v1459 = vsel %vm250, %v1420, -inf
      %v1460 = vmax.f32 %v1458, %v1459
      %v1461 = vsel %vm250, %v1426, -inf
      %v1462 = vmax.f32 %v1460, %v1461
      %v1463 = vsel %vm250, %v1409, -inf
      %v1464 = vsel %vm250, %v1415, -inf
      %v1465 = vmax.f32 %v1463, %v1464
      %v1466 = vsel %vm250, %v1421, -inf
      %v1467 = vmax.f32 %v1465, %v1466
      %v1468 = vsel %vm250, %v1427, -inf
      %v1469 = vmax.f32 %v1467, %v1468
      %v1470 = vsub.f32 %v1404, %v1434
      %v1471 = vsub.f32 %v1405, %v1441
      %v1472 = vsub.f32 %v1406, %v1448
      %v1473 = vsub.f32 %v1407, %v1455
      %v1474 = vsub.f32 %v1408, %v1462
      %v1475 = vsub.f32 %v1409, %v1469
      %v1476 = vsub.f32 %v1410, %v1434
      %v1477 = vsub.f32 %v1411, %v1441
      %v1478 = vsub.f32 %v1412, %v1448
      %v1479 = vsub.f32 %v1413, %v1455
      %v1480 = vsub.f32 %v1414, %v1462
      %v1481 = vsub.f32 %v1415, %v1469
      %v1482 = vsub.f32 %v1416, %v1434
      %v1483 = vsub.f32 %v1417, %v1441
      %v1484 = vsub.f32 %v1418, %v1448
      %v1485 = vsub.f32 %v1419, %v1455
      %v1486 = vsub.f32 %v1420, %v1462
      %v1487 = vsub.f32 %v1421, %v1469
      %v1488 = vsub.f32 %v1422, %v1434
      %v1489 = vsub.f32 %v1423, %v1441
      %v1490 = vsub.f32 %v1424, %v1448
      %v1491 = vsub.f32 %v1425, %v1455
      %v1492 = vsub.f32 %v1426, %v1462
      %v1493 = vsub.f32 %v1427, %v1469
      %v1494 = vmul.f32 %v1470, 100.0
      %v1495 = vmul.f32 %v1471, 100.0
      %v1496 = vmul.f32 %v1472, 100.0
      %v1497 = vmul.f32 %v1473, 100.0
      %v1498 = vmul.f32 %v1474, 100.0
      %v1499 = vmul.f32 %v1475, 100.0
      %v1500 = vmul.f32 %v1476, 100.0
      %v1501 = vmul.f32 %v1477, 100.0
      %v1502 = vmul.f32 %v1478, 100.0
      %v1503 = vmul.f32 %v1479, 100.0
      %v1504 = vmul.f32 %v1480, 100.0
      %v1505 = vmul.f32 %v1481, 100.0
      %v1506 = vmul.f32 %v1482, 100.0
      %v1507 = vmul.f32 %v1483, 100.0
      %v1508 = vmul.f32 %v1484, 100.0
      %v1509 = vmul.f32 %v1485, 100.0
      %v1510 = vmul.f32 %v1486, 100.0
      %v1511 = vmul.f32 %v1487, 100.0
      %v1512 = vmul.f32 %v1488, 100.0
      %v1513 = vmul.f32 %v1489, 100.0
      %v1514 = vmul.f32 %v1490, 100.0
      %v1515 = vmul.f32 %v1491, 100.0
      %v1516 = vmul.f32 %v1492, 100.0
      %v1517 = vmul.f32 %v1493, 100.0
      %v1518 = vmul.f32 %v1494, 1.442695
      %v1519 = vpow.pop %v1518
      %v1520 = vmul.f32 %v1495, 1.442695
      %v1521 = vpow.pop %v1520
      %v1522 = vmul.f32 %v1496, 1.442695
      %v1523 = vpow.pop %v1522
      %v1524 = vmul.f32 %v1497, 1.442695
      %v1525 = vpow.pop %v1524
      %v1526 = vmul.f32 %v1498, 1.442695
      %v1527 = vpow.pop %v1526
      %v1528 = vmul.f32 %v1499, 1.442695
      %v1529 = vpow.pop %v1528
      %v1530 = vmul.f32 %v1500, 1.442695
      %v1531 = vpow.pop %v1530
      %v1532 = vmul.f32 %v1501, 1.442695
      %v1533 = vpow.pop %v1532
      %v1534 = vmul.f32 %v1502, 1.442695
      %v1535 = vpow.pop %v1534
      %v1536 = vmul.f32 %v1503, 1.442695
      %v1537 = vpow.pop %v1536
      %v1538 = vmul.f32 %v1504, 1.442695
      %v1539 = vpow.pop %v1538
      %v1540 = vmul.f32 %v1505, 1.442695
      %v1541 = vpow.pop %v1540
      %v1542 = vmul.f32 %v1506, 1.442695
      %v1543 = vpow.pop %v1542
      %v1544 = vmul.f32 %v1507, 1.442695
      %v1545 = vpow.pop %v1544
      %v1546 = vmul.f32 %v1508, 1.442695
      %v1547 = vpow.pop %v1546
      %v1548 = vmul.f32 %v1509, 1.442695
      %v1549 = vpow.pop %v1548
      %v1550 = vmul.f32 %v1510, 1.442695
      %v1551 = vpow.pop %v1550
      %v1552 = vmul.f32 %v1511, 1.442695
      %v1553 = vpow.pop %v1552
      %v1554 = vmul.f32 %v1512, 1.442695
      %v1555 = vpow.pop %v1554
      %v1556 = vmul.f32 %v1513, 1.442695
      %v1557 = vpow.pop %v1556
      %v1558 = vmul.f32 %v1514, 1.442695
      %v1559 = vpow.pop %v1558
      %v1560 = vmul.f32 %v1515, 1.442695
      %v1561 = vpow.pop %v1560
      %v1562 = vmul.f32 %v1516, 1.442695
      %v1563 = vpow.pop %v1562
      %v1564 = vmul.f32 %v1517, 1.442695
      %v1565 = vpow.pop %v1564
      %v1566 = vsel %vm250, %v1519, 0.0
      %v1567 = vsel %vm250, %v1531, 0.0
      %v1568 = vadd.f32 %v1566, %v1567
      %v1569 = vsel %vm250, %v1543, 0.0
      %v1570 = vadd.f32 %v1568, %v1569
      %v1571 = vsel %vm250, %v1555, 0.0
      %v1572 = vadd.f32 %v1570, %v1571
      %v1573 = vsel %vm250, %v1521, 0.0
      %v1574 = vsel %vm250, %v1533, 0.0
      %v1575 = vadd.f32 %v1573, %v1574
      %v1576 = vsel %vm250, %v1545, 0.0
      %v1577 = vadd.f32 %v1575, %v1576
      %v1578 = vsel %vm250, %v1557, 0.0
      %v1579 = vadd.f32 %v1577, %v1578
      %v1580 = vsel %vm250, %v1523, 0.0
      %v1581 = vsel %vm250, %v1535, 0.0
      %v1582 = vadd.f32 %v1580, %v1581
      %v1583 = vsel %vm250, %v1547, 0.0
      %v1584 = vadd.f32 %v1582, %v1583
      %v1585 = vsel %vm250, %v1559, 0.0
      %v1586 = vadd.f32 %v1584, %v1585
      %v1587 = vsel %vm250, %v1525, 0.0
      %v1588 = vsel %vm250, %v1537, 0.0
      %v1589 = vadd.f32 %v1587, %v1588
      %v1590 = vsel %vm250, %v1549, 0.0
      %v1591 = vadd.f32 %v1589, %v1590
      %v1592 = vsel %vm250, %v1561, 0.0
      %v1593 = vadd.f32 %v1591, %v1592
      %v1594 = vsel %vm250, %v1527, 0.0
      %v1595 = vsel %vm250, %v1539, 0.0
      %v1596 = vadd.f32 %v1594, %v1595
      %v1597 = vsel %vm250, %v1551, 0.0
      %v1598 = vadd.f32 %v1596, %v1597
      %v1599 = vsel %vm250, %v1563, 0.0
      %v1600 = vadd.f32 %v1598, %v1599
      %v1601 = vsel %vm250, %v1529, 0.0
      %v1602 = vsel %vm250, %v1541, 0.0
      %v1603 = vadd.f32 %v1601, %v1602
      %v1604 = vsel %vm250, %v1553, 0.0
      %v1605 = vadd.f32 %v1603, %v1604
      %v1606 = vsel %vm250, %v1565, 0.0
      %v1607 = vadd.f32 %v1605, %v1606
      %v1608 = vadd.f32 %v1572, 1e-08
      %v1609 = vadd.f32 %v1579, 1e-08
      %v1610 = vadd.f32 %v1586, 1e-08
      %v1611 = vadd.f32 %v1593, 1e-08
      %v1612 = vadd.f32 %v1600, 1e-08
      %v1613 = vadd.f32 %v1607, 1e-08
      %v1614 = vrcp.pop %v1608
      %v1615 = vmul.f32 1.0, %v1614
      %v1616 = vrcp.pop %v1609
      %v1617 = vmul.f32 1.0, %v1616
      %v1618 = vrcp.pop %v1610
      %v1619 = vmul.f32 1.0, %v1618
      %v1620 = vrcp.pop %v1611
      %v1621 = vmul.f32 1.0, %v1620
      %v1622 = vrcp.pop %v1612
      %v1623 = vmul.f32 1.0, %v1622
      %v1624 = vrcp.pop %v1613
      %v1625 = vmul.f32 1.0, %v1624
      %v1626 = vmul.f32 %v1404, %v1519
      %v1627 = vmul.f32 %v1405, %v1521
      %v1628 = vmul.f32 %v1406, %v1523
      %v1629 = vmul.f32 %v1407, %v1525
      %v1630 = vmul.f32 %v1408, %v1527
      %v1631 = vmul.f32 %v1409, %v1529
      %v1632 = vmul.f32 %v1410, %v1531
      %v1633 = vmul.f32 %v1411, %v1533
      %v1634 = vmul.f32 %v1412, %v1535
      %v1635 = vmul.f32 %v1413, %v1537
      %v1636 = vmul.f32 %v1414, %v1539
      %v1637 = vmul.f32 %v1415, %v1541
      %v1638 = vmul.f32 %v1416, %v1543
      %v1639 = vmul.f32 %v1417, %v1545
      %v1640 = vmul.f32 %v1418, %v1547
      %v1641 = vmul.f32 %v1419, %v1549
      %v1642 = vmul.f32 %v1420, %v1551
      %v1643 = vmul.f32 %v1421, %v1553
      %v1644 = vmul.f32 %v1422, %v1555
      %v1645 = vmul.f32 %v1423, %v1557
      %v1646 = vmul.f32 %v1424, %v1559
      %v1647 = vmul.f32 %v1425, %v1561
      %v1648 = vmul.f32 %v1426, %v1563
      %v1649 = vmul.f32 %v1427, %v1565
      %v1650 = vsel %vm250, %v1626, 0.0
      %v1651 = vsel %vm250, %v1632, 0.0
      %v1652 = vadd.f32 %v1650, %v1651
      %v1653 = vsel %vm250, %v1638, 0.0
      %v1654 = vadd.f32 %v1652, %v1653
      %v1655 = vsel %vm250, %v1644, 0.0
      %v1656 = vadd.f32 %v1654, %v1655
      %v1657 = vsel %vm250, %v1627, 0.0
      %v1658 = vsel %vm250, %v1633, 0.0
      %v1659 = vadd.f32 %v1657, %v1658
      %v1660 = vsel %vm250, %v1639, 0.0
      %v1661 = vadd.f32 %v1659, %v1660
      %v1662 = vsel %vm250, %v1645, 0.0
      %v1663 = vadd.f32 %v1661, %v1662
      %v1664 = vsel %vm250, %v1628, 0.0
      %v1665 = vsel %vm250, %v1634, 0.0
      %v1666 = vadd.f32 %v1664, %v1665
      %v1667 = vsel %vm250, %v1640, 0.0
      %v1668 = vadd.f32 %v1666, %v1667
      %v1669 = vsel %vm250, %v1646, 0.0
      %v1670 = vadd.f32 %v1668, %v1669
      %v1671 = vsel %vm250, %v1629, 0.0
      %v1672 = vsel %vm250, %v1635, 0.0
      %v1673 = vadd.f32 %v1671, %v1672
      %v1674 = vsel %vm250, %v1641, 0.0
      %v1675 = vadd.f32 %v1673, %v1674
      %v1676 = vsel %vm250, %v1647, 0.0
      %v1677 = vadd.f32 %v1675, %v1676
      %v1678 = vsel %vm250, %v1630, 0.0
      %v1679 = vsel %vm250, %v1636, 0.0
      %v1680 = vadd.f32 %v1678, %v1679
      %v1681 = vsel %vm250, %v1642, 0.0
      %v1682 = vadd.f32 %v1680, %v1681
      %v1683 = vsel %vm250, %v1648, 0.0
      %v1684 = vadd.f32 %v1682, %v1683
      %v1685 = vsel %vm250, %v1631, 0.0
      %v1686 = vsel %vm250, %v1637, 0.0
      %v1687 = vadd.f32 %v1685, %v1686
      %v1688 = vsel %vm250, %v1643, 0.0
      %v1689 = vadd.f32 %v1687, %v1688
      %v1690 = vsel %vm250, %v1649, 0.0
      %v1691 = vadd.f32 %v1689, %v1690
      %v1692 = vmul.f32 %v1656, %v1615
      %v1693 = vmul.f32 %v1663, %v1617
      %v1694 = vmul.f32 %v1670, %v1619
      %v1695 = vmul.f32 %v1677, %v1621
      %v1696 = vmul.f32 %v1684, %v1623
      %v1697 = vmul.f32 %v1691, %v1625
      %v1698 = vld [vmem:[%s3] sm:$0xff]
      %v1699 = vld [vmem:[%s3 + $0x8] sm:$0xff]
      %v1700 = vld [vmem:[%s3 + $0x10] sm:$0xff]
      %v1701 = vld [vmem:[%s3 + $0x18] sm:$0xff]
      %v1702 = vld [vmem:[%s3 + $0x20] sm:$0xff]
      %v1703 = vld [vmem:[%s3 + $0x28] sm:$0xff]
      %v1704 = vmul.f32 %v1692, %v1698
      %v1705 = vmul.f32 %v1693, %v1699
      %v1706 = vmul.f32 %v1694, %v1700
      %v1707 = vmul.f32 %v1695, %v1701
      %v1708 = vmul.f32 %v1696, %v1702
      %v1709 = vmul.f32 %v1697, %v1703
      %vm1710 = vcmp.lt.f32.partialorder %v1704, 0.0
      %vm1711 = vcmp.lt.f32.partialorder %v1705, 0.0
      %vm1712 = vcmp.lt.f32.partialorder %v1706, 0.0
      %vm1713 = vcmp.lt.f32.partialorder %v1707, 0.0
      %vm1714 = vcmp.lt.f32.partialorder %v1708, 0.0
      %vm1715 = vcmp.lt.f32.partialorder %v1709, 0.0
      %v1716 = vsel %vm1710, 0.0, %v1704
      %v1717 = vsel %vm1711, 0.0, %v1705
      %v1718 = vsel %vm1712, 0.0, %v1706
      %v1719 = vsel %vm1713, 0.0, %v1707
      %v1720 = vsel %vm1714, 0.0, %v1708
      %v1721 = vsel %vm1715, 0.0, %v1709
      %1728 = vrot.lane.b32.xlu0 %v1716, 1
      %v1729 = vpop.permute.xlu0 %1728
      %1730 = vrot.lane.b32.xlu0 %v1717, 1
      %v1731 = vpop.permute.xlu0 %1730
      %1732 = vrot.lane.b32.xlu0 %v1718, 1
      %v1733 = vpop.permute.xlu0 %1732
      %1734 = vrot.lane.b32.xlu0 %v1719, 1
      %v1735 = vpop.permute.xlu0 %1734
      %1736 = vrot.lane.b32.xlu0 %v1720, 1
      %v1737 = vpop.permute.xlu0 %1736
      %1738 = vrot.lane.b32.xlu0 %v1721, 1
      %v1739 = vpop.permute.xlu0 %1738
      %v1746 = vsel %vm754, 0.0, %v1729
      %v1747 = vsel %vm754, 0.0, %v1731
      %v1748 = vsel %vm754, 0.0, %v1733
      %v1749 = vsel %vm754, 0.0, %v1735
      %v1750 = vsel %vm754, 0.0, %v1737
      %v1751 = vsel %vm754, 0.0, %v1739
      %1752 = vrot.lane.b32.xlu0 %v1716, 127
      %v1753 = vpop.permute.xlu0 %1752
      %1754 = vrot.lane.b32.xlu0 %v1717, 127
      %v1755 = vpop.permute.xlu0 %1754
      %1756 = vrot.lane.b32.xlu0 %v1718, 127
      %v1757 = vpop.permute.xlu0 %1756
      %1758 = vrot.lane.b32.xlu0 %v1719, 127
      %v1759 = vpop.permute.xlu0 %1758
      %1760 = vrot.lane.b32.xlu0 %v1720, 127
      %v1761 = vpop.permute.xlu0 %1760
      %1762 = vrot.lane.b32.xlu0 %v1721, 127
      %v1763 = vpop.permute.xlu0 %1762
      %v1770 = vsel %vm649, %v1753, 0.0
      %v1771 = vsel %vm649, %v1755, 0.0
      %v1772 = vsel %vm649, %v1757, 0.0
      %v1773 = vsel %vm649, %v1759, 0.0
      %v1774 = vsel %vm649, %v1761, 0.0
      %v1775 = vsel %vm649, %v1763, 0.0
      %1776 = vrot.lane.b32.xlu0 %v1716, 2
      %v1777 = vpop.permute.xlu0 %1776
      %1778 = vrot.lane.b32.xlu0 %v1717, 2
      %v1779 = vpop.permute.xlu0 %1778
      %1780 = vrot.lane.b32.xlu0 %v1718, 2
      %v1781 = vpop.permute.xlu0 %1780
      %1782 = vrot.lane.b32.xlu0 %v1719, 2
      %v1783 = vpop.permute.xlu0 %1782
      %1784 = vrot.lane.b32.xlu0 %v1720, 2
      %v1785 = vpop.permute.xlu0 %1784
      %1786 = vrot.lane.b32.xlu0 %v1721, 2
      %v1787 = vpop.permute.xlu0 %1786
      %v1794 = vsel %vm791, 0.0, %v1777
      %v1795 = vsel %vm791, 0.0, %v1779
      %v1796 = vsel %vm791, 0.0, %v1781
      %v1797 = vsel %vm791, 0.0, %v1783
      %v1798 = vsel %vm791, 0.0, %v1785
      %v1799 = vsel %vm791, 0.0, %v1787
      %1800 = vrot.lane.b32.xlu0 %v1716, 126
      %v1801 = vpop.permute.xlu0 %1800
      %1802 = vrot.lane.b32.xlu0 %v1717, 126
      %v1803 = vpop.permute.xlu0 %1802
      %1804 = vrot.lane.b32.xlu0 %v1718, 126
      %v1805 = vpop.permute.xlu0 %1804
      %1806 = vrot.lane.b32.xlu0 %v1719, 126
      %v1807 = vpop.permute.xlu0 %1806
      %1808 = vrot.lane.b32.xlu0 %v1720, 126
      %v1809 = vpop.permute.xlu0 %1808
      %1810 = vrot.lane.b32.xlu0 %v1721, 126
      %v1811 = vpop.permute.xlu0 %1810
      %v1818 = vsel %vm686, %v1801, 0.0
      %v1819 = vsel %vm686, %v1803, 0.0
      %v1820 = vsel %vm686, %v1805, 0.0
      %v1821 = vsel %vm686, %v1807, 0.0
      %v1822 = vsel %vm686, %v1809, 0.0
      %v1823 = vsel %vm686, %v1811, 0.0
      %v1824 = vmax.f32 %v1746, %v1770
      %v1825 = vmax.f32 %v1747, %v1771
      %v1826 = vmax.f32 %v1748, %v1772
      %v1827 = vmax.f32 %v1749, %v1773
      %v1828 = vmax.f32 %v1750, %v1774
      %v1829 = vmax.f32 %v1751, %v1775
      %v1830 = vmax.f32 %v1794, %v1818
      %v1831 = vmax.f32 %v1795, %v1819
      %v1832 = vmax.f32 %v1796, %v1820
      %v1833 = vmax.f32 %v1797, %v1821
      %v1834 = vmax.f32 %v1798, %v1822
      %v1835 = vmax.f32 %v1799, %v1823
      %v1836 = vmax.f32 %v1824, %v1830
      %v1837 = vmax.f32 %v1825, %v1831
      %v1838 = vmax.f32 %v1826, %v1832
      %v1839 = vmax.f32 %v1827, %v1833
      %v1840 = vmax.f32 %v1828, %v1834
      %v1841 = vmax.f32 %v1829, %v1835
      %v1842 = vmax.f32 %v1836, %v1716
      %v1843 = vmax.f32 %v1837, %v1717
      %v1844 = vmax.f32 %v1838, %v1718
      %v1845 = vmax.f32 %v1839, %v1719
      %v1846 = vmax.f32 %v1840, %v1720
      %v1847 = vmax.f32 %v1841, %v1721
      %v1854 = vrot.slane %v1842, 7
      %v1855 = vrot.slane %v1843, 7
      %v1856 = vsel %vm940, %v1854, %v1855
      %v1857 = vrot.slane %v1844, 7
      %v1858 = vsel %vm940, %v1855, %v1857
      %v1859 = vrot.slane %v1845, 7
      %v1860 = vsel %vm940, %v1857, %v1859
      %v1861 = vrot.slane %v1846, 7
      %v1862 = vsel %vm940, %v1859, %v1861
      %v1863 = vrot.slane %v1847, 7
      %v1864 = vsel %vm940, %v1861, %v1863
      %v1871 = vsel %vm940, 0.0, %v1854
      %v1872 = vrot.slane %v1842, 1
      %v1873 = vrot.slane %v1843, 1
      %v1874 = vsel %vm853, %v1872, %v1873
      %v1875 = vrot.slane %v1844, 1
      %v1876 = vsel %vm853, %v1873, %v1875
      %v1877 = vrot.slane %v1845, 1
      %v1878 = vsel %vm853, %v1875, %v1877
      %v1879 = vrot.slane %v1846, 1
      %v1880 = vsel %vm853, %v1877, %v1879
      %v1881 = vrot.slane %v1847, 1
      %v1882 = vsel %vm853, %v1879, %v1881
      %v1889 = vsel %vm853, %v1881, 0.0
      %v1890 = vrot.slane %v1842, 6
      %v1891 = vrot.slane %v1843, 6
      %v1892 = vsel %vm971, %v1890, %v1891
      %v1893 = vrot.slane %v1844, 6
      %v1894 = vsel %vm971, %v1891, %v1893
      %v1895 = vrot.slane %v1845, 6
      %v1896 = vsel %vm971, %v1893, %v1895
      %v1897 = vrot.slane %v1846, 6
      %v1898 = vsel %vm971, %v1895, %v1897
      %v1899 = vrot.slane %v1847, 6
      %v1900 = vsel %vm971, %v1897, %v1899
      %v1907 = vsel %vm971, 0.0, %v1890
      %v1908 = vrot.slane %v1842, 2
      %v1909 = vrot.slane %v1843, 2
      %v1910 = vsel %vm884, %v1908, %v1909
      %v1911 = vrot.slane %v1844, 2
      %v1912 = vsel %vm884, %v1909, %v1911
      %v1913 = vrot.slane %v1845, 2
      %v1914 = vsel %vm884, %v1911, %v1913
      %v1915 = vrot.slane %v1846, 2
      %v1916 = vsel %vm884, %v1913, %v1915
      %v1917 = vrot.slane %v1847, 2
      %v1918 = vsel %vm884, %v1915, %v1917
      %v1925 = vsel %vm884, %v1917, 0.0
      %v1926 = vmax.f32 %v1871, %v1874
      %v1927 = vmax.f32 %v1856, %v1876
      %v1928 = vmax.f32 %v1858, %v1878
      %v1929 = vmax.f32 %v1860, %v1880
      %v1930 = vmax.f32 %v1862, %v1882
      %v1931 = vmax.f32 %v1864, %v1889
      %v1932 = vmax.f32 %v1907, %v1910
      %v1933 = vmax.f32 %v1892, %v1912
      %v1934 = vmax.f32 %v1894, %v1914
      %v1935 = vmax.f32 %v1896, %v1916
      %v1936 = vmax.f32 %v1898, %v1918
      %v1937 = vmax.f32 %v1900, %v1925
      %v1938 = vmax.f32 %v1926, %v1932
      %v1939 = vmax.f32 %v1927, %v1933
      %v1940 = vmax.f32 %v1928, %v1934
      %v1941 = vmax.f32 %v1929, %v1935
      %v1942 = vmax.f32 %v1930, %v1936
      %v1943 = vmax.f32 %v1931, %v1937
      %v1944 = vmax.f32 %v1836, %v1938
      %v1945 = vmax.f32 %v1837, %v1939
      %v1946 = vmax.f32 %v1838, %v1940
      %v1947 = vmax.f32 %v1839, %v1941
      %v1948 = vmax.f32 %v1840, %v1942
      %v1949 = vmax.f32 %v1841, %v1943
      %vm1950 = vcmp.gt.f32.partialorder %v1716, %v1944
      %vm1951 = vcmp.gt.f32.partialorder %v1717, %v1945
      %vm1952 = vcmp.gt.f32.partialorder %v1718, %v1946
      %vm1953 = vcmp.gt.f32.partialorder %v1719, %v1947
      %vm1954 = vcmp.gt.f32.partialorder %v1720, %v1948
      %vm1955 = vcmp.gt.f32.partialorder %v1721, %v1949
      %s1956 = scalar_lea.vmem %s3, 48
      %v1957 = vld [vmem:[%s1956] sm:$0xff]
      %v1958 = vld [vmem:[%s1956 + $0x8] sm:$0xff]
      %v1959 = vld [vmem:[%s1956 + $0x10] sm:$0xff]
      %v1960 = vld [vmem:[%s1956 + $0x18] sm:$0xff]
      %v1961 = vld [vmem:[%s1956 + $0x20] sm:$0xff]
      %v1962 = vld [vmem:[%s1956 + $0x28] sm:$0xff]
      %v1963 = vmul.f32 %v1704, %v1957
      %v1964 = vmul.f32 %v1705, %v1958
      %v1965 = vmul.f32 %v1706, %v1959
      %v1966 = vmul.f32 %v1707, %v1960
      %v1967 = vmul.f32 %v1708, %v1961
      %v1968 = vmul.f32 %v1709, %v1962
      %v1969 = vsel %vm1950, %v1963, 0.0
      %v1970 = vsel %vm1951, %v1964, 0.0
      %v1971 = vsel %vm1952, %v1965, 0.0
      %v1972 = vsel %vm1953, %v1966, 0.0
      %v1973 = vsel %vm1954, %v1967, 0.0
      %v1974 = vsel %vm1955, %v1968, 0.0
      %v1975 = vsel %vm250, %v1969, -1.0
      %v1976 = vsel %vm250, %v1970, -1.0
      %v1977 = vsel %vm250, %v1971, -1.0
      %v1978 = vsel %vm250, %v1972, -1.0
      %v1979 = vsel %vm250, %v1973, -1.0
      %v1980 = vsel %vm250, %v1974, -1.0
      %1981 = vst [vmem:[%s225] sm:$0xff] %v1975
      %1982 = vst [vmem:[%s225 + $0x8] sm:$0xff] %v1976
      %1983 = vst [vmem:[%s225 + $0x10] sm:$0xff] %v1977
      %1984 = vst [vmem:[%s225 + $0x18] sm:$0xff] %v1978
      %1985 = vst [vmem:[%s225 + $0x20] sm:$0xff] %v1979
      %1986 = vst [vmem:[%s225 + $0x28] sm:$0xff] %v1980
      %p1987 = scmp.lt.s32.totalorder %s17, 3
      %s1988 = scalar_select %p1987, %s17, 3
      %s1989 = smul.addr %s1988, 6
      %s1990 = smul.addr %s1989, 8
      %s1991 = scalar_lea.vmem %s5, %s1990
      // Predicated region
      $region41: #{lf_net_forward.1} parent=39 // pred_check
        %p1992 = pneg %p145
      $region42: #{lf_net_forward.1} parent=39 // pred_check_branch
        %1994 = sbr.rel (%p1992) target = $region44
      $region43: #{lf_net_forward.1} parent=39 // pred_region
        _
      $region44: #{lf_net_forward.1} parent=39 // pred_fallthru
        _
    $region40: #{lf_net_forward.1} parent=5 // pred_fallthru
      _
    %p1995 = scmp.le.s32.totalorder 2, %s12
    // Predicated region
    $region45: #{lf_net_forward.1} parent=5 // pred_check
      %p1996 = pneg %p1995
    $region46: #{lf_net_forward.1} parent=5 // pred_check_branch
      %1998 = sbr.rel (%p1996) target = $region48
    $region47: #{lf_net_forward.1} parent=5 // pred_region
      %s1999 = ssub.s32 %s12, 2
      // Predicated region
      $region49: #{lf_net_forward.1} parent=47 // pred_check
        %p2000 = pneg %p151
      $region50: #{lf_net_forward.1} parent=47 // pred_check_branch
        %2002 = sbr.rel (%p2000) target = $region52
      $region51: #{lf_net_forward.1} parent=47 // pred_region
        %p2003 = scmp.lt.s32.totalorder %s18, 3
        %s2004 = scalar_select %p2003, %s18, 3
        %s2005 = smul.addr %s2004, 6
        %s2006 = smul.addr %s2005, 8
        %s2007 = scalar_lea.vmem %s5, %s2006
      $region52: #{lf_net_forward.1} parent=47 // pred_fallthru
        _
    $region48: #{lf_net_forward.1} parent=5 // pred_fallthru
      _
  $region6: #{lf_net_forward.1} parent=0 // loop_footer
    %s16 = sadd.s32 1, %s12
  $region7: #{lf_net_forward.1} parent=0 // loop_footer_branch
    %11 = sbr.rel target = $region3
  $region8: #{lf_net_forward.1} parent=0 // loop_exit
    _

</llo_original>
